<compile_context>
chip_gen: v7x
topology: tpu7x:2x2x1
jax: 0.10.0
libtpu: 0.0.40
codegen_flags: <defaults>
</compile_context>

<pallas_src>
import jax
import jax.numpy as jnp
from jax.experimental import pallas as pl
from jax.experimental.pallas import tpu as pltpu

INPUT_SIZE = 14
D_MODEL = 32
NUM_HEADS = 4
NUM_LAYERS = 3
HIDDEN_DIM = 64
OUTPUT_SIZE = 1
LN_EPS = 1e-5  # torch nn.LayerNorm default


def _round_up(n, m):
    return ((n + m - 1) // m) * m


def _normalize(x):
    # LayerNorm statistics over the feature (sublane) axis, single-pass form so
    # both reductions can issue back-to-back; biased variance (torch semantics).
    mu = jnp.mean(x, axis=0, keepdims=True)
    ms = jnp.mean(x * x, axis=0, keepdims=True)
    var = ms - mu * mu
    return (x - mu) * jax.lax.rsqrt(var + LN_EPS)


def transformer_kernel(
    x_ref,        # (14, TB)        bf16   batch on lanes
    w_in_ref,     # (32, 14)        bf16   input_fc^T
    attn_w_ref,   # (3, 32, 32)     bf16   (I + Wv@Wo)^T, prev ln2 gamma folded
    ff1_w_ref,    # (3, 64, 32)     bf16
    ff2_w_ref,    # (3, 32, 64)     bf16
    w_out_ref,    # (1, 32)         bf16   fc_out^T, final ln2 gamma folded
    b_in_ref,     # (32, 1)         f32
    vecs_ref,     # (3, 128, 1)     f32    per layer [attn_b | ln1_g | ln1_b | ff2_b]
    ff1_b_ref,    # (3, 64, 1)      f32
    b_out_ref,    # (1, 1)          f32
    o_ref,        # (1, TB)         f32    lane-dense output
):
    x = x_ref[...]
    # input_fc (feature-major): (32,14) @ (14,TB) -> (32,TB)
    h = jnp.dot(w_in_ref[...], x, preferred_element_type=jnp.float32) + b_in_ref[...]

    for l in range(NUM_LAYERS):
        attn_b = vecs_ref[l, 0 * D_MODEL:1 * D_MODEL, :]   # (32,1)
        ln1_g = vecs_ref[l, 1 * D_MODEL:2 * D_MODEL, :]
        ln1_b = vecs_ref[l, 2 * D_MODEL:3 * D_MODEL, :]
        ff2_b = vecs_ref[l, 3 * D_MODEL:4 * D_MODEL, :]

        # self-attention block (seq_len==1) + residual, fully folded into one matmul
        z1 = jnp.dot(attn_w_ref[l], h.astype(jnp.bfloat16),
                     preferred_element_type=jnp.float32) + attn_b          # (32,TB)
        h1 = _normalize(z1) * ln1_g + ln1_b                                 # ln1

        # feed-forward block: Linear -> ReLU -> Linear (dropout = identity)
        ff = jnp.dot(ff1_w_ref[l], h1.astype(jnp.bfloat16),
                     preferred_element_type=jnp.float32) + ff1_b_ref[l]     # (64,TB)
        ff = jnp.maximum(ff, 0.0)
        ff = jnp.dot(ff2_w_ref[l], ff.astype(jnp.bfloat16),
                     preferred_element_type=jnp.float32) + ff2_b            # (32,TB)

        # ln2: affine (gamma,beta) is folded into the next consumer's matmul.
        h = _normalize(h1 + ff)

    # mean over the length-1 seq dim is identity; fc_out as (1,32)@(32,TB) -> (1,TB)
    o_ref[...] = (jnp.dot(w_out_ref[...], h.astype(jnp.bfloat16),
                          preferred_element_type=jnp.float32) + b_out_ref[...])


def make_params(key):
    """Deterministic synthetic parameters in torch-equivalent layout,
    pre-transposed to (in_features, out_features)."""
    ks = iter(jax.random.split(key, 16))

    def rnd(shape, scale=0.1):
        return scale * jax.random.normal(next(ks), shape, dtype=jnp.float32)

    p = {}
    p["w_in"] = rnd((INPUT_SIZE, D_MODEL))
    p["b_in"] = rnd((1, D_MODEL))
    p["in_proj_w"] = rnd((NUM_LAYERS, D_MODEL, 3 * D_MODEL))
    p["in_proj_b"] = rnd((NUM_LAYERS, 1, 3 * D_MODEL))
    p["out_proj_w"] = rnd((NUM_LAYERS, D_MODEL, D_MODEL))
    p["out_proj_b"] = rnd((NUM_LAYERS, 1, D_MODEL))
    p["ln1_w"] = jnp.ones((NUM_LAYERS, 1, D_MODEL), jnp.float32)
    p["ln1_b"] = jnp.zeros((NUM_LAYERS, 1, D_MODEL), jnp.float32)
    p["ln2_w"] = jnp.ones((NUM_LAYERS, 1, D_MODEL), jnp.float32)
    p["ln2_b"] = jnp.zeros((NUM_LAYERS, 1, D_MODEL), jnp.float32)
    p["ff1_w"] = rnd((NUM_LAYERS, D_MODEL, HIDDEN_DIM))
    p["ff1_b"] = rnd((NUM_LAYERS, 1, HIDDEN_DIM))
    p["ff2_w"] = rnd((NUM_LAYERS, HIDDEN_DIM, D_MODEL))
    p["ff2_b"] = rnd((NUM_LAYERS, 1, D_MODEL))
    p["w_out"] = rnd((D_MODEL, OUTPUT_SIZE))
    p["b_out"] = rnd((1, OUTPUT_SIZE))
    return p


def fold_params(p):
    """Host-side algebraic folding.

    * seq_len==1 attention:  h + attn(h) = h @ (I + Wv@Wo) + (bv@Wo + bo).
    * ln2 affine of layer l is folded into layer l+1's attn matrix (which
      already contains the residual identity), and layer L-1's ln2 into fc_out:
        (g*n + b) @ A + c  =  n @ (diag(g)A) + (b@A + c).
    * Everything is transposed to feature-major (out, in) and matmul weights
      are cast to bf16; biases stay f32 column vectors.
    """
    D, L = D_MODEL, NUM_LAYERS
    wv = p["in_proj_w"][:, :, 2 * D:3 * D]                  # (L, D, D)  (in,out)
    bv = p["in_proj_b"][:, :, 2 * D:3 * D]                  # (L, 1, D)
    eye = jnp.eye(D, dtype=jnp.float32)[None]
    M = jnp.einsum("lik,lkj->lij", wv, p["out_proj_w"]) + eye               # (L,D,D)
    c = jnp.einsum("lik,lkj->lij", bv, p["out_proj_w"]) + p["out_proj_b"]   # (L,1,D)

    attn_w_rm, attn_b_rm = [], []
    for l in range(L):
        A = M[l]
        b = c[l]
        if l > 0:  # fold previous layer's ln2 affine into this matmul
            g2 = p["ln2_w"][l - 1].reshape(D)
            b2 = p["ln2_b"][l - 1]                       # (1, D)
            b = b + b2 @ A                               # uses original A
            A = A * g2[:, None]
        attn_w_rm.append(A)
        attn_b_rm.append(b)
    attn_w_rm = jnp.stack(attn_w_rm)                     # (L, D, D)  (in,out)
    attn_b_rm = jnp.stack(attn_b_rm)                     # (L, 1, D)

    # fold the last layer's ln2 affine into fc_out
    gL = p["ln2_w"][L - 1].reshape(D)
    bL = p["ln2_b"][L - 1]                               # (1, D)
    b_out = bL @ p["w_out"] + p["b_out"]                 # (1, 1)
    w_out = p["w_out"] * gL[:, None]                     # (D, 1)

    bf = jnp.bfloat16
    fp = {
        "w_in":   p["w_in"].T.astype(bf),                                # (32,14)
        "attn_w": jnp.transpose(attn_w_rm, (0, 2, 1)).astype(bf),        # (L,32,32)
        "ff1_w":  jnp.transpose(p["ff1_w"], (0, 2, 1)).astype(bf),       # (L,64,32)
        "ff2_w":  jnp.transpose(p["ff2_w"], (0, 2, 1)).astype(bf),       # (L,32,64)
        "w_out":  w_out.T.astype(bf),                                    # (1,32)
        "b_in":   p["b_in"].T.astype(jnp.float32),                       # (32,1)
        "ff1_b":  jnp.transpose(p["ff1_b"], (0, 2, 1)).astype(jnp.float32),  # (L,64,1)
        "b_out":  b_out.astype(jnp.float32),                             # (1,1)
        "vecs":   jnp.concatenate(                                       # (L,128,1)
            [jnp.transpose(attn_b_rm, (0, 2, 1)),
             jnp.transpose(p["ln1_w"], (0, 2, 1)),
             jnp.transpose(p["ln1_b"], (0, 2, 1)),
             jnp.transpose(p["ff2_b"], (0, 2, 1))], axis=1
        ).astype(jnp.float32),
    }
    return fp


def transformer_forward(x, fp, *, batch_tile=4096):
    """x: (B, 14) float32, fp: folded params (see fold_params). Returns (B, 1) f32."""
    B = x.shape[0]
    # Lane-dense batch tiles: TB must be a multiple of 128.  Cap TB so the grid
    # has >= 2 steps whenever B is big enough (feeds both TCs on v7x).
    TB = min(_round_up(batch_tile, 128), _round_up(max((B + 1) // 2, 1), 128))
    TB = max(TB, 128)
    B_pad = _round_up(B, TB)
    if B_pad != B:
        x = jnp.pad(x, ((0, B_pad - B), (0, 0)))
    xt = x.T.astype(jnp.bfloat16)                        # (14, B_pad), batch on lanes

    def const2(shape):
        return pl.BlockSpec(shape, lambda i: (0, 0))

    def const3(shape):
        return pl.BlockSpec(shape, lambda i: (0, 0, 0))

    in_specs = [
        pl.BlockSpec((INPUT_SIZE, TB), lambda i: (0, i)),          # x, streamed
        const2((D_MODEL, INPUT_SIZE)),                             # w_in
        const3((NUM_LAYERS, D_MODEL, D_MODEL)),                    # attn_w
        const3((NUM_LAYERS, HIDDEN_DIM, D_MODEL)),                 # ff1_w
        const3((NUM_LAYERS, D_MODEL, HIDDEN_DIM)),                 # ff2_w
        const2((OUTPUT_SIZE, D_MODEL)),                            # w_out
        const2((D_MODEL, 1)),                                      # b_in
        const3((NUM_LAYERS, 4 * D_MODEL, 1)),                      # vecs
        const3((NUM_LAYERS, HIDDEN_DIM, 1)),                       # ff1_b
        const2((OUTPUT_SIZE, 1)),                                  # b_out
    ]
    out_spec = pl.BlockSpec((OUTPUT_SIZE, TB), lambda i: (0, i))   # lane-dense output

    weight_bytes = sum(int(v.size) * v.dtype.itemsize for v in fp.values())
    flops = 2 * B_pad * (INPUT_SIZE * D_MODEL
                         + NUM_LAYERS * (D_MODEL * D_MODEL + 2 * D_MODEL * HIDDEN_DIM)
                         + D_MODEL * OUTPUT_SIZE)
    cost = pl.CostEstimate(
        flops=flops,
        transcendentals=2 * NUM_LAYERS * B_pad,                    # rsqrt per LN per row
        bytes_accessed=B_pad * (2 * INPUT_SIZE + 4 * OUTPUT_SIZE) + weight_bytes,
    )

    out = pl.pallas_call(
        transformer_kernel,
        out_shape=jax.ShapeDtypeStruct((OUTPUT_SIZE, B_pad), jnp.float32),
        grid=(B_pad // TB,),
        in_specs=in_specs,
        out_specs=out_spec,
        compiler_params=pltpu.CompilerParams(
            dimension_semantics=("parallel",),     # independent batch tiles -> v7x TCs
        ),
        cost_estimate=cost,
    )(
        xt, fp["w_in"], fp["attn_w"], fp["ff1_w"], fp["ff2_w"], fp["w_out"],
        fp["b_in"], fp["vecs"], fp["ff1_b"], fp["b_out"],
    )
    return out[:, :B].T                                            # (B, 1)


if __name__ == "__main__":
    key = jax.random.PRNGKey(0)
    kx, kp = jax.random.split(key)
    B = 8
    x = jax.random.normal(kx, (B, INPUT_SIZE), dtype=jnp.float32)  # torch input (B, 14)
    params = make_params(kp)
    folded = fold_params(params)
    out = transformer_forward(x, folded)
    out = jax.block_until_ready(out)
    assert out.shape == (B, OUTPUT_SIZE) and out.dtype == jnp.float32
    assert bool(jnp.all(jnp.isfinite(out)))
    print("KERNEL_OK")
</pallas_src>

<mosaic_0001>
module attributes {stable_mosaic.version = 11 : i64} {
  func.func @transformer_kernel(%arg0: i32, %arg1: memref<14x128xbf16, #tpu.memory_space<vmem>>, %arg2: memref<32x14xbf16, #tpu.memory_space<vmem>>, %arg3: memref<3x32x32xbf16, #tpu.memory_space<vmem>>, %arg4: memref<3x64x32xbf16, #tpu.memory_space<vmem>>, %arg5: memref<3x32x64xbf16, #tpu.memory_space<vmem>>, %arg6: memref<1x32xbf16, #tpu.memory_space<vmem>>, %arg7: memref<32x1xf32, #tpu.memory_space<vmem>>, %arg8: memref<3x128x1xf32, #tpu.memory_space<vmem>>, %arg9: memref<3x64x1xf32, #tpu.memory_space<vmem>>, %arg10: memref<1x1xf32, #tpu.memory_space<vmem>>, %arg11: memref<1x128xf32, #tpu.memory_space<vmem>>) attributes {dimension_semantics = [#tpu.dimension_semantics<parallel>], iteration_bounds = array<i64: 1>, scalar_prefetch = 0 : i64, scratch_operands = 0 : i64, tpu.core_type = #tpu.core_type<tc>, window_params = [{transform_indices = @transform_0, window_bounds = array<i64: 14, 128>}, {pipeline_mode = #tpu.pipeline_mode<synchronous>, transform_indices = @transform_1, window_bounds = array<i64: 32, 14>}, {pipeline_mode = #tpu.pipeline_mode<synchronous>, transform_indices = @transform_2, window_bounds = array<i64: 3, 32, 32>}, {pipeline_mode = #tpu.pipeline_mode<synchronous>, transform_indices = @transform_3, window_bounds = array<i64: 3, 64, 32>}, {pipeline_mode = #tpu.pipeline_mode<synchronous>, transform_indices = @transform_4, window_bounds = array<i64: 3, 32, 64>}, {pipeline_mode = #tpu.pipeline_mode<synchronous>, transform_indices = @transform_5, window_bounds = array<i64: 1, 32>}, {pipeline_mode = #tpu.pipeline_mode<synchronous>, transform_indices = @transform_6, window_bounds = array<i64: 32, 1>}, {pipeline_mode = #tpu.pipeline_mode<synchronous>, transform_indices = @transform_7, window_bounds = array<i64: 3, 128, 1>}, {pipeline_mode = #tpu.pipeline_mode<synchronous>, transform_indices = @transform_8, window_bounds = array<i64: 3, 64, 1>}, {pipeline_mode = #tpu.pipeline_mode<synchronous>, transform_indices = @transform_9, window_bounds = array<i64: 1, 1>}, {transform_indices = @transform_10, window_bounds = array<i64: 1, 128>}]} {
    %c0 = arith.constant 0 : index
    %c0_0 = arith.constant 0 : index
    %0 = vector.load %arg1[%c0, %c0_0] : memref<14x128xbf16, #tpu.memory_space<vmem>>, vector<14x128xbf16>
    %c0_1 = arith.constant 0 : index
    %c0_2 = arith.constant 0 : index
    %1 = vector.load %arg2[%c0_1, %c0_2] : memref<32x14xbf16, #tpu.memory_space<vmem>>, vector<32x14xbf16>
    %cst = arith.constant dense<0.000000e+00> : vector<32x128xf32>
    %2 = tpu.matmul %1, %0, %cst {dimension_numbers = #tpu.dot_dimension_numbers<[1], [0], [0], [1], [0, 0, 1, 1], [], []>} : vector<32x14xbf16>, vector<14x128xbf16>, vector<32x128xf32> -> vector<32x128xf32>
    %c0_3 = arith.constant 0 : index
    %c0_4 = arith.constant 0 : index
    %3 = vector.load %arg7[%c0_3, %c0_4] : memref<32x1xf32, #tpu.memory_space<vmem>>, vector<32x1xf32>
    %4 = vector.broadcast %3 : vector<32x1xf32> to vector<32x128xf32>
    %5 = arith.addf %2, %4 : vector<32x128xf32>
    %c0_5 = arith.constant 0 : index
    %c0_6 = arith.constant 0 : index
    %c0_7 = arith.constant 0 : index
    %6 = vector.load %arg8[%c0_5, %c0_6, %c0_7] : memref<3x128x1xf32, #tpu.memory_space<vmem>>, vector<1x32x1xf32>
    %7 = vector.shape_cast %6 : vector<1x32x1xf32> to vector<32x1xf32>
    %c0_8 = arith.constant 0 : index
    %c32 = arith.constant 32 : index
    %c0_9 = arith.constant 0 : index
    %8 = vector.load %arg8[%c0_8, %c32, %c0_9] : memref<3x128x1xf32, #tpu.memory_space<vmem>>, vector<1x32x1xf32>
    %9 = vector.shape_cast %8 : vector<1x32x1xf32> to vector<32x1xf32>
    %c0_10 = arith.constant 0 : index
    %c64 = arith.constant 64 : index
    %c0_11 = arith.constant 0 : index
    %10 = vector.load %arg8[%c0_10, %c64, %c0_11] : memref<3x128x1xf32, #tpu.memory_space<vmem>>, vector<1x32x1xf32>
    %11 = vector.shape_cast %10 : vector<1x32x1xf32> to vector<32x1xf32>
    %c0_12 = arith.constant 0 : index
    %c96 = arith.constant 96 : index
    %c0_13 = arith.constant 0 : index
    %12 = vector.load %arg8[%c0_12, %c96, %c0_13] : memref<3x128x1xf32, #tpu.memory_space<vmem>>, vector<1x32x1xf32>
    %13 = vector.shape_cast %12 : vector<1x32x1xf32> to vector<32x1xf32>
    %c0_14 = arith.constant 0 : index
    %c0_15 = arith.constant 0 : index
    %c0_16 = arith.constant 0 : index
    %14 = vector.load %arg3[%c0_14, %c0_15, %c0_16] : memref<3x32x32xbf16, #tpu.memory_space<vmem>>, vector<1x32x32xbf16>
    %15 = vector.shape_cast %14 : vector<1x32x32xbf16> to vector<32x32xbf16>
    %16 = arith.truncf %5 : vector<32x128xf32> to vector<32x128xbf16>
    %cst_17 = arith.constant dense<0.000000e+00> : vector<32x128xf32>
    %17 = tpu.matmul %15, %16, %cst_17 {dimension_numbers = #tpu.dot_dimension_numbers<[1], [0], [0], [1], [0, 0, 1, 1], [], []>} : vector<32x32xbf16>, vector<32x128xbf16>, vector<32x128xf32> -> vector<32x128xf32>
    %18 = vector.broadcast %7 : vector<32x1xf32> to vector<32x128xf32>
    %19 = arith.addf %17, %18 : vector<32x128xf32>
    %cst_18 = arith.constant dense<0.000000e+00> : vector<128xf32>
    %20 = vector.multi_reduction <add>, %19, %cst_18 [0] : vector<32x128xf32> to vector<128xf32>
    %21 = vector.shape_cast %20 : vector<128xf32> to vector<1x128xf32>
    %cst_19 = arith.constant 3.200000e+01 : f32
    %22 = vector.broadcast %cst_19 : f32 to vector<1x128xf32>
    %23 = arith.divf %21, %22 : vector<1x128xf32>
    %24 = arith.mulf %19, %19 : vector<32x128xf32>
    %cst_20 = arith.constant dense<0.000000e+00> : vector<128xf32>
    %25 = vector.multi_reduction <add>, %24, %cst_20 [0] : vector<32x128xf32> to vector<128xf32>
    %26 = vector.shape_cast %25 : vector<128xf32> to vector<1x128xf32>
    %cst_21 = arith.constant 3.200000e+01 : f32
    %27 = vector.broadcast %cst_21 : f32 to vector<1x128xf32>
    %28 = arith.divf %26, %27 : vector<1x128xf32>
    %29 = arith.mulf %23, %23 : vector<1x128xf32>
    %30 = arith.subf %28, %29 : vector<1x128xf32>
    %31 = vector.broadcast %23 : vector<1x128xf32> to vector<32x128xf32>
    %32 = arith.subf %19, %31 : vector<32x128xf32>
    %cst_22 = arith.constant 9.99999974E-6 : f32
    %33 = vector.broadcast %cst_22 : f32 to vector<1x128xf32>
    %34 = arith.addf %30, %33 : vector<1x128xf32>
    %35 = math.rsqrt %34 : vector<1x128xf32>
    %36 = vector.broadcast %35 : vector<1x128xf32> to vector<32x128xf32>
    %37 = arith.mulf %32, %36 : vector<32x128xf32>
    %38 = vector.broadcast %9 : vector<32x1xf32> to vector<32x128xf32>
    %39 = arith.mulf %37, %38 : vector<32x128xf32>
    %40 = vector.broadcast %11 : vector<32x1xf32> to vector<32x128xf32>
    %41 = arith.addf %39, %40 : vector<32x128xf32>
    %c0_23 = arith.constant 0 : index
    %c0_24 = arith.constant 0 : index
    %c0_25 = arith.constant 0 : index
    %42 = vector.load %arg4[%c0_23, %c0_24, %c0_25] : memref<3x64x32xbf16, #tpu.memory_space<vmem>>, vector<1x64x32xbf16>
    %43 = vector.shape_cast %42 : vector<1x64x32xbf16> to vector<64x32xbf16>
    %44 = arith.truncf %41 : vector<32x128xf32> to vector<32x128xbf16>
    %cst_26 = arith.constant dense<0.000000e+00> : vector<64x128xf32>
    %45 = tpu.matmul %43, %44, %cst_26 {dimension_numbers = #tpu.dot_dimension_numbers<[1], [0], [0], [1], [0, 0, 1, 1], [], []>} : vector<64x32xbf16>, vector<32x128xbf16>, vector<64x128xf32> -> vector<64x128xf32>
    %c0_27 = arith.constant 0 : index
    %c0_28 = arith.constant 0 : index
    %c0_29 = arith.constant 0 : index
    %46 = vector.load %arg9[%c0_27, %c0_28, %c0_29] : memref<3x64x1xf32, #tpu.memory_space<vmem>>, vector<1x64x1xf32>
    %47 = vector.shape_cast %46 : vector<1x64x1xf32> to vector<64x1xf32>
    %48 = vector.broadcast %47 : vector<64x1xf32> to vector<64x128xf32>
    %49 = arith.addf %45, %48 : vector<64x128xf32>
    %cst_30 = arith.constant 0.000000e+00 : f32
    %50 = vector.broadcast %cst_30 : f32 to vector<64x128xf32>
    %51 = arith.maximumf %49, %50 : vector<64x128xf32>
    %c0_31 = arith.constant 0 : index
    %c0_32 = arith.constant 0 : index
    %c0_33 = arith.constant 0 : index
    %52 = vector.load %arg5[%c0_31, %c0_32, %c0_33] : memref<3x32x64xbf16, #tpu.memory_space<vmem>>, vector<1x32x64xbf16>
    %53 = vector.shape_cast %52 : vector<1x32x64xbf16> to vector<32x64xbf16>
    %54 = arith.truncf %51 : vector<64x128xf32> to vector<64x128xbf16>
    %cst_34 = arith.constant dense<0.000000e+00> : vector<32x128xf32>
    %55 = tpu.matmul %53, %54, %cst_34 {dimension_numbers = #tpu.dot_dimension_numbers<[1], [0], [0], [1], [0, 0, 1, 1], [], []>} : vector<32x64xbf16>, vector<64x128xbf16>, vector<32x128xf32> -> vector<32x128xf32>
    %56 = vector.broadcast %13 : vector<32x1xf32> to vector<32x128xf32>
    %57 = arith.addf %55, %56 : vector<32x128xf32>
    %58 = arith.addf %41, %57 : vector<32x128xf32>
    %cst_35 = arith.constant dense<0.000000e+00> : vector<128xf32>
    %59 = vector.multi_reduction <add>, %58, %cst_35 [0] : vector<32x128xf32> to vector<128xf32>
    %60 = vector.shape_cast %59 : vector<128xf32> to vector<1x128xf32>
    %cst_36 = arith.constant 3.200000e+01 : f32
    %61 = vector.broadcast %cst_36 : f32 to vector<1x128xf32>
    %62 = arith.divf %60, %61 : vector<1x128xf32>
    %63 = arith.mulf %58, %58 : vector<32x128xf32>
    %cst_37 = arith.constant dense<0.000000e+00> : vector<128xf32>
    %64 = vector.multi_reduction <add>, %63, %cst_37 [0] : vector<32x128xf32> to vector<128xf32>
    %65 = vector.shape_cast %64 : vector<128xf32> to vector<1x128xf32>
    %cst_38 = arith.constant 3.200000e+01 : f32
    %66 = vector.broadcast %cst_38 : f32 to vector<1x128xf32>
    %67 = arith.divf %65, %66 : vector<1x128xf32>
    %68 = arith.mulf %62, %62 : vector<1x128xf32>
    %69 = arith.subf %67, %68 : vector<1x128xf32>
    %70 = vector.broadcast %62 : vector<1x128xf32> to vector<32x128xf32>
    %71 = arith.subf %58, %70 : vector<32x128xf32>
    %cst_39 = arith.constant 9.99999974E-6 : f32
    %72 = vector.broadcast %cst_39 : f32 to vector<1x128xf32>
    %73 = arith.addf %69, %72 : vector<1x128xf32>
    %74 = math.rsqrt %73 : vector<1x128xf32>
    %75 = vector.broadcast %74 : vector<1x128xf32> to vector<32x128xf32>
    %76 = arith.mulf %71, %75 : vector<32x128xf32>
    %c1 = arith.constant 1 : index
    %c0_40 = arith.constant 0 : index
    %c0_41 = arith.constant 0 : index
    %77 = vector.load %arg8[%c1, %c0_40, %c0_41] : memref<3x128x1xf32, #tpu.memory_space<vmem>>, vector<1x32x1xf32>
    %78 = vector.shape_cast %77 : vector<1x32x1xf32> to vector<32x1xf32>
    %c1_42 = arith.constant 1 : index
    %c32_43 = arith.constant 32 : index
    %c0_44 = arith.constant 0 : index
    %79 = vector.load %arg8[%c1_42, %c32_43, %c0_44] : memref<3x128x1xf32, #tpu.memory_space<vmem>>, vector<1x32x1xf32>
    %80 = vector.shape_cast %79 : vector<1x32x1xf32> to vector<32x1xf32>
    %c1_45 = arith.constant 1 : index
    %c64_46 = arith.constant 64 : index
    %c0_47 = arith.constant 0 : index
    %81 = vector.load %arg8[%c1_45, %c64_46, %c0_47] : memref<3x128x1xf32, #tpu.memory_space<vmem>>, vector<1x32x1xf32>
    %82 = vector.shape_cast %81 : vector<1x32x1xf32> to vector<32x1xf32>
    %c1_48 = arith.constant 1 : index
    %c96_49 = arith.constant 96 : index
    %c0_50 = arith.constant 0 : index
    %83 = vector.load %arg8[%c1_48, %c96_49, %c0_50] : memref<3x128x1xf32, #tpu.memory_space<vmem>>, vector<1x32x1xf32>
    %84 = vector.shape_cast %83 : vector<1x32x1xf32> to vector<32x1xf32>
    %c1_51 = arith.constant 1 : index
    %c0_52 = arith.constant 0 : index
    %c0_53 = arith.constant 0 : index
    %85 = vector.load %arg3[%c1_51, %c0_52, %c0_53] : memref<3x32x32xbf16, #tpu.memory_space<vmem>>, vector<1x32x32xbf16>
    %86 = vector.shape_cast %85 : vector<1x32x32xbf16> to vector<32x32xbf16>
    %87 = arith.truncf %76 : vector<32x128xf32> to vector<32x128xbf16>
    %cst_54 = arith.constant dense<0.000000e+00> : vector<32x128xf32>
    %88 = tpu.matmul %86, %87, %cst_54 {dimension_numbers = #tpu.dot_dimension_numbers<[1], [0], [0], [1], [0, 0, 1, 1], [], []>} : vector<32x32xbf16>, vector<32x128xbf16>, vector<32x128xf32> -> vector<32x128xf32>
    %89 = vector.broadcast %78 : vector<32x1xf32> to vector<32x128xf32>
    %90 = arith.addf %88, %89 : vector<32x128xf32>
    %cst_55 = arith.constant dense<0.000000e+00> : vector<128xf32>
    %91 = vector.multi_reduction <add>, %90, %cst_55 [0] : vector<32x128xf32> to vector<128xf32>
    %92 = vector.shape_cast %91 : vector<128xf32> to vector<1x128xf32>
    %cst_56 = arith.constant 3.200000e+01 : f32
    %93 = vector.broadcast %cst_56 : f32 to vector<1x128xf32>
    %94 = arith.divf %92, %93 : vector<1x128xf32>
    %95 = arith.mulf %90, %90 : vector<32x128xf32>
    %cst_57 = arith.constant dense<0.000000e+00> : vector<128xf32>
    %96 = vector.multi_reduction <add>, %95, %cst_57 [0] : vector<32x128xf32> to vector<128xf32>
    %97 = vector.shape_cast %96 : vector<128xf32> to vector<1x128xf32>
    %cst_58 = arith.constant 3.200000e+01 : f32
    %98 = vector.broadcast %cst_58 : f32 to vector<1x128xf32>
    %99 = arith.divf %97, %98 : vector<1x128xf32>
    %100 = arith.mulf %94, %94 : vector<1x128xf32>
    %101 = arith.subf %99, %100 : vector<1x128xf32>
    %102 = vector.broadcast %94 : vector<1x128xf32> to vector<32x128xf32>
    %103 = arith.subf %90, %102 : vector<32x128xf32>
    %cst_59 = arith.constant 9.99999974E-6 : f32
    %104 = vector.broadcast %cst_59 : f32 to vector<1x128xf32>
    %105 = arith.addf %101, %104 : vector<1x128xf32>
    %106 = math.rsqrt %105 : vector<1x128xf32>
    %107 = vector.broadcast %106 : vector<1x128xf32> to vector<32x128xf32>
    %108 = arith.mulf %103, %107 : vector<32x128xf32>
    %109 = vector.broadcast %80 : vector<32x1xf32> to vector<32x128xf32>
    %110 = arith.mulf %108, %109 : vector<32x128xf32>
    %111 = vector.broadcast %82 : vector<32x1xf32> to vector<32x128xf32>
    %112 = arith.addf %110, %111 : vector<32x128xf32>
    %c1_60 = arith.constant 1 : index
    %c0_61 = arith.constant 0 : index
    %c0_62 = arith.constant 0 : index
    %113 = vector.load %arg4[%c1_60, %c0_61, %c0_62] : memref<3x64x32xbf16, #tpu.memory_space<vmem>>, vector<1x64x32xbf16>
    %114 = vector.shape_cast %113 : vector<1x64x32xbf16> to vector<64x32xbf16>
    %115 = arith.truncf %112 : vector<32x128xf32> to vector<32x128xbf16>
    %cst_63 = arith.constant dense<0.000000e+00> : vector<64x128xf32>
    %116 = tpu.matmul %114, %115, %cst_63 {dimension_numbers = #tpu.dot_dimension_numbers<[1], [0], [0], [1], [0, 0, 1, 1], [], []>} : vector<64x32xbf16>, vector<32x128xbf16>, vector<64x128xf32> -> vector<64x128xf32>
    %c1_64 = arith.constant 1 : index
    %c0_65 = arith.constant 0 : index
    %c0_66 = arith.constant 0 : index
    %117 = vector.load %arg9[%c1_64, %c0_65, %c0_66] : memref<3x64x1xf32, #tpu.memory_space<vmem>>, vector<1x64x1xf32>
    %118 = vector.shape_cast %117 : vector<1x64x1xf32> to vector<64x1xf32>
    %119 = vector.broadcast %118 : vector<64x1xf32> to vector<64x128xf32>
    %120 = arith.addf %116, %119 : vector<64x128xf32>
    %cst_67 = arith.constant 0.000000e+00 : f32
    %121 = vector.broadcast %cst_67 : f32 to vector<64x128xf32>
    %122 = arith.maximumf %120, %121 : vector<64x128xf32>
    %c1_68 = arith.constant 1 : index
    %c0_69 = arith.constant 0 : index
    %c0_70 = arith.constant 0 : index
    %123 = vector.load %arg5[%c1_68, %c0_69, %c0_70] : memref<3x32x64xbf16, #tpu.memory_space<vmem>>, vector<1x32x64xbf16>
    %124 = vector.shape_cast %123 : vector<1x32x64xbf16> to vector<32x64xbf16>
    %125 = arith.truncf %122 : vector<64x128xf32> to vector<64x128xbf16>
    %cst_71 = arith.constant dense<0.000000e+00> : vector<32x128xf32>
    %126 = tpu.matmul %124, %125, %cst_71 {dimension_numbers = #tpu.dot_dimension_numbers<[1], [0], [0], [1], [0, 0, 1, 1], [], []>} : vector<32x64xbf16>, vector<64x128xbf16>, vector<32x128xf32> -> vector<32x128xf32>
    %127 = vector.broadcast %84 : vector<32x1xf32> to vector<32x128xf32>
    %128 = arith.addf %126, %127 : vector<32x128xf32>
    %129 = arith.addf %112, %128 : vector<32x128xf32>
    %cst_72 = arith.constant dense<0.000000e+00> : vector<128xf32>
    %130 = vector.multi_reduction <add>, %129, %cst_72 [0] : vector<32x128xf32> to vector<128xf32>
    %131 = vector.shape_cast %130 : vector<128xf32> to vector<1x128xf32>
    %cst_73 = arith.constant 3.200000e+01 : f32
    %132 = vector.broadcast %cst_73 : f32 to vector<1x128xf32>
    %133 = arith.divf %131, %132 : vector<1x128xf32>
    %134 = arith.mulf %129, %129 : vector<32x128xf32>
    %cst_74 = arith.constant dense<0.000000e+00> : vector<128xf32>
    %135 = vector.multi_reduction <add>, %134, %cst_74 [0] : vector<32x128xf32> to vector<128xf32>
    %136 = vector.shape_cast %135 : vector<128xf32> to vector<1x128xf32>
    %cst_75 = arith.constant 3.200000e+01 : f32
    %137 = vector.broadcast %cst_75 : f32 to vector<1x128xf32>
    %138 = arith.divf %136, %137 : vector<1x128xf32>
    %139 = arith.mulf %133, %133 : vector<1x128xf32>
    %140 = arith.subf %138, %139 : vector<1x128xf32>
    %141 = vector.broadcast %133 : vector<1x128xf32> to vector<32x128xf32>
    %142 = arith.subf %129, %141 : vector<32x128xf32>
    %cst_76 = arith.constant 9.99999974E-6 : f32
    %143 = vector.broadcast %cst_76 : f32 to vector<1x128xf32>
    %144 = arith.addf %140, %143 : vector<1x128xf32>
    %145 = math.rsqrt %144 : vector<1x128xf32>
    %146 = vector.broadcast %145 : vector<1x128xf32> to vector<32x128xf32>
    %147 = arith.mulf %142, %146 : vector<32x128xf32>
    %c2 = arith.constant 2 : index
    %c0_77 = arith.constant 0 : index
    %c0_78 = arith.constant 0 : index
    %148 = vector.load %arg8[%c2, %c0_77, %c0_78] : memref<3x128x1xf32, #tpu.memory_space<vmem>>, vector<1x32x1xf32>
    %149 = vector.shape_cast %148 : vector<1x32x1xf32> to vector<32x1xf32>
    %c2_79 = arith.constant 2 : index
    %c32_80 = arith.constant 32 : index
    %c0_81 = arith.constant 0 : index
    %150 = vector.load %arg8[%c2_79, %c32_80, %c0_81] : memref<3x128x1xf32, #tpu.memory_space<vmem>>, vector<1x32x1xf32>
    %151 = vector.shape_cast %150 : vector<1x32x1xf32> to vector<32x1xf32>
    %c2_82 = arith.constant 2 : index
    %c64_83 = arith.constant 64 : index
    %c0_84 = arith.constant 0 : index
    %152 = vector.load %arg8[%c2_82, %c64_83, %c0_84] : memref<3x128x1xf32, #tpu.memory_space<vmem>>, vector<1x32x1xf32>
    %153 = vector.shape_cast %152 : vector<1x32x1xf32> to vector<32x1xf32>
    %c2_85 = arith.constant 2 : index
    %c96_86 = arith.constant 96 : index
    %c0_87 = arith.constant 0 : index
    %154 = vector.load %arg8[%c2_85, %c96_86, %c0_87] : memref<3x128x1xf32, #tpu.memory_space<vmem>>, vector<1x32x1xf32>
    %155 = vector.shape_cast %154 : vector<1x32x1xf32> to vector<32x1xf32>
    %c2_88 = arith.constant 2 : index
    %c0_89 = arith.constant 0 : index
    %c0_90 = arith.constant 0 : index
    %156 = vector.load %arg3[%c2_88, %c0_89, %c0_90] : memref<3x32x32xbf16, #tpu.memory_space<vmem>>, vector<1x32x32xbf16>
    %157 = vector.shape_cast %156 : vector<1x32x32xbf16> to vector<32x32xbf16>
    %158 = arith.truncf %147 : vector<32x128xf32> to vector<32x128xbf16>
    %cst_91 = arith.constant dense<0.000000e+00> : vector<32x128xf32>
    %159 = tpu.matmul %157, %158, %cst_91 {dimension_numbers = #tpu.dot_dimension_numbers<[1], [0], [0], [1], [0, 0, 1, 1], [], []>} : vector<32x32xbf16>, vector<32x128xbf16>, vector<32x128xf32> -> vector<32x128xf32>
    %160 = vector.broadcast %149 : vector<32x1xf32> to vector<32x128xf32>
    %161 = arith.addf %159, %160 : vector<32x128xf32>
    %cst_92 = arith.constant dense<0.000000e+00> : vector<128xf32>
    %162 = vector.multi_reduction <add>, %161, %cst_92 [0] : vector<32x128xf32> to vector<128xf32>
    %163 = vector.shape_cast %162 : vector<128xf32> to vector<1x128xf32>
    %cst_93 = arith.constant 3.200000e+01 : f32
    %164 = vector.broadcast %cst_93 : f32 to vector<1x128xf32>
    %165 = arith.divf %163, %164 : vector<1x128xf32>
    %166 = arith.mulf %161, %161 : vector<32x128xf32>
    %cst_94 = arith.constant dense<0.000000e+00> : vector<128xf32>
    %167 = vector.multi_reduction <add>, %166, %cst_94 [0] : vector<32x128xf32> to vector<128xf32>
    %168 = vector.shape_cast %167 : vector<128xf32> to vector<1x128xf32>
    %cst_95 = arith.constant 3.200000e+01 : f32
    %169 = vector.broadcast %cst_95 : f32 to vector<1x128xf32>
    %170 = arith.divf %168, %169 : vector<1x128xf32>
    %171 = arith.mulf %165, %165 : vector<1x128xf32>
    %172 = arith.subf %170, %171 : vector<1x128xf32>
    %173 = vector.broadcast %165 : vector<1x128xf32> to vector<32x128xf32>
    %174 = arith.subf %161, %173 : vector<32x128xf32>
    %cst_96 = arith.constant 9.99999974E-6 : f32
    %175 = vector.broadcast %cst_96 : f32 to vector<1x128xf32>
    %176 = arith.addf %172, %175 : vector<1x128xf32>
    %177 = math.rsqrt %176 : vector<1x128xf32>
    %178 = vector.broadcast %177 : vector<1x128xf32> to vector<32x128xf32>
    %179 = arith.mulf %174, %178 : vector<32x128xf32>
    %180 = vector.broadcast %151 : vector<32x1xf32> to vector<32x128xf32>
    %181 = arith.mulf %179, %180 : vector<32x128xf32>
    %182 = vector.broadcast %153 : vector<32x1xf32> to vector<32x128xf32>
    %183 = arith.addf %181, %182 : vector<32x128xf32>
    %c2_97 = arith.constant 2 : index
    %c0_98 = arith.constant 0 : index
    %c0_99 = arith.constant 0 : index
    %184 = vector.load %arg4[%c2_97, %c0_98, %c0_99] : memref<3x64x32xbf16, #tpu.memory_space<vmem>>, vector<1x64x32xbf16>
    %185 = vector.shape_cast %184 : vector<1x64x32xbf16> to vector<64x32xbf16>
    %186 = arith.truncf %183 : vector<32x128xf32> to vector<32x128xbf16>
    %cst_100 = arith.constant dense<0.000000e+00> : vector<64x128xf32>
    %187 = tpu.matmul %185, %186, %cst_100 {dimension_numbers = #tpu.dot_dimension_numbers<[1], [0], [0], [1], [0, 0, 1, 1], [], []>} : vector<64x32xbf16>, vector<32x128xbf16>, vector<64x128xf32> -> vector<64x128xf32>
    %c2_101 = arith.constant 2 : index
    %c0_102 = arith.constant 0 : index
    %c0_103 = arith.constant 0 : index
    %188 = vector.load %arg9[%c2_101, %c0_102, %c0_103] : memref<3x64x1xf32, #tpu.memory_space<vmem>>, vector<1x64x1xf32>
    %189 = vector.shape_cast %188 : vector<1x64x1xf32> to vector<64x1xf32>
    %190 = vector.broadcast %189 : vector<64x1xf32> to vector<64x128xf32>
    %191 = arith.addf %187, %190 : vector<64x128xf32>
    %cst_104 = arith.constant 0.000000e+00 : f32
    %192 = vector.broadcast %cst_104 : f32 to vector<64x128xf32>
    %193 = arith.maximumf %191, %192 : vector<64x128xf32>
    %c2_105 = arith.constant 2 : index
    %c0_106 = arith.constant 0 : index
    %c0_107 = arith.constant 0 : index
    %194 = vector.load %arg5[%c2_105, %c0_106, %c0_107] : memref<3x32x64xbf16, #tpu.memory_space<vmem>>, vector<1x32x64xbf16>
    %195 = vector.shape_cast %194 : vector<1x32x64xbf16> to vector<32x64xbf16>
    %196 = arith.truncf %193 : vector<64x128xf32> to vector<64x128xbf16>
    %cst_108 = arith.constant dense<0.000000e+00> : vector<32x128xf32>
    %197 = tpu.matmul %195, %196, %cst_108 {dimension_numbers = #tpu.dot_dimension_numbers<[1], [0], [0], [1], [0, 0, 1, 1], [], []>} : vector<32x64xbf16>, vector<64x128xbf16>, vector<32x128xf32> -> vector<32x128xf32>
    %198 = vector.broadcast %155 : vector<32x1xf32> to vector<32x128xf32>
    %199 = arith.addf %197, %198 : vector<32x128xf32>
    %200 = arith.addf %183, %199 : vector<32x128xf32>
    %cst_109 = arith.constant dense<0.000000e+00> : vector<128xf32>
    %201 = vector.multi_reduction <add>, %200, %cst_109 [0] : vector<32x128xf32> to vector<128xf32>
    %202 = vector.shape_cast %201 : vector<128xf32> to vector<1x128xf32>
    %cst_110 = arith.constant 3.200000e+01 : f32
    %203 = vector.broadcast %cst_110 : f32 to vector<1x128xf32>
    %204 = arith.divf %202, %203 : vector<1x128xf32>
    %205 = arith.mulf %200, %200 : vector<32x128xf32>
    %cst_111 = arith.constant dense<0.000000e+00> : vector<128xf32>
    %206 = vector.multi_reduction <add>, %205, %cst_111 [0] : vector<32x128xf32> to vector<128xf32>
    %207 = vector.shape_cast %206 : vector<128xf32> to vector<1x128xf32>
    %cst_112 = arith.constant 3.200000e+01 : f32
    %208 = vector.broadcast %cst_112 : f32 to vector<1x128xf32>
    %209 = arith.divf %207, %208 : vector<1x128xf32>
    %210 = arith.mulf %204, %204 : vector<1x128xf32>
    %211 = arith.subf %209, %210 : vector<1x128xf32>
    %212 = vector.broadcast %204 : vector<1x128xf32> to vector<32x128xf32>
    %213 = arith.subf %200, %212 : vector<32x128xf32>
    %cst_113 = arith.constant 9.99999974E-6 : f32
    %214 = vector.broadcast %cst_113 : f32 to vector<1x128xf32>
    %215 = arith.addf %211, %214 : vector<1x128xf32>
    %216 = math.rsqrt %215 : vector<1x128xf32>
    %217 = vector.broadcast %216 : vector<1x128xf32> to vector<32x128xf32>
    %218 = arith.mulf %213, %217 : vector<32x128xf32>
    %c0_114 = arith.constant 0 : index
    %c0_115 = arith.constant 0 : index
    %219 = vector.load %arg6[%c0_114, %c0_115] : memref<1x32xbf16, #tpu.memory_space<vmem>>, vector<1x32xbf16>
    %220 = arith.truncf %218 : vector<32x128xf32> to vector<32x128xbf16>
    %cst_116 = arith.constant dense<0.000000e+00> : vector<1x128xf32>
    %221 = tpu.matmul %219, %220, %cst_116 {dimension_numbers = #tpu.dot_dimension_numbers<[1], [0], [0], [1], [0, 0, 1, 1], [], []>} : vector<1x32xbf16>, vector<32x128xbf16>, vector<1x128xf32> -> vector<1x128xf32>
    %c0_117 = arith.constant 0 : index
    %c0_118 = arith.constant 0 : index
    %222 = vector.load %arg10[%c0_117, %c0_118] : memref<1x1xf32, #tpu.memory_space<vmem>>, vector<1x1xf32>
    %223 = vector.broadcast %222 : vector<1x1xf32> to vector<1x128xf32>
    %224 = arith.addf %221, %223 : vector<1x128xf32>
    %c0_119 = arith.constant 0 : index
    %c0_120 = arith.constant 0 : index
    %225 = vector.load %arg11[%c0_119, %c0_120] : memref<1x128xf32, #tpu.memory_space<vmem>>, vector<1x128xf32>
    tpu.vector_store %arg11[%c0_119, %c0_120], %224 {strides = array<i32>} : memref<1x128xf32, #tpu.memory_space<vmem>>, vector<1x128xf32>,
    return
  }
  func.func @transform_0(%arg0: i32) -> (i32, i32) {
    %c0_i32 = arith.constant 0 : i32
    %c0_i32_0 = arith.constant 0 : i32
    return %c0_i32, %arg0 : i32, i32
  }
  func.func @transform_1(%arg0: i32) -> (i32, i32) {
    %c0_i32 = arith.constant 0 : i32
    %c0_i32_0 = arith.constant 0 : i32
    %c0_i32_1 = arith.constant 0 : i32
    return %c0_i32, %c0_i32_0 : i32, i32
  }
  func.func @transform_2(%arg0: i32) -> (i32, i32, i32) {
    %c0_i32 = arith.constant 0 : i32
    %c0_i32_0 = arith.constant 0 : i32
    %c0_i32_1 = arith.constant 0 : i32
    %c0_i32_2 = arith.constant 0 : i32
    return %c0_i32, %c0_i32_0, %c0_i32_1 : i32, i32, i32
  }
  func.func @transform_3(%arg0: i32) -> (i32, i32, i32) {
    %c0_i32 = arith.constant 0 : i32
    %c0_i32_0 = arith.constant 0 : i32
    %c0_i32_1 = arith.constant 0 : i32
    %c0_i32_2 = arith.constant 0 : i32
    return %c0_i32, %c0_i32_0, %c0_i32_1 : i32, i32, i32
  }
  func.func @transform_4(%arg0: i32) -> (i32, i32, i32) {
    %c0_i32 = arith.constant 0 : i32
    %c0_i32_0 = arith.constant 0 : i32
    %c0_i32_1 = arith.constant 0 : i32
    %c0_i32_2 = arith.constant 0 : i32
    return %c0_i32, %c0_i32_0, %c0_i32_1 : i32, i32, i32
  }
  func.func @transform_5(%arg0: i32) -> (i32, i32) {
    %c0_i32 = arith.constant 0 : i32
    %c0_i32_0 = arith.constant 0 : i32
    %c0_i32_1 = arith.constant 0 : i32
    return %c0_i32, %c0_i32_0 : i32, i32
  }
  func.func @transform_6(%arg0: i32) -> (i32, i32) {
    %c0_i32 = arith.constant 0 : i32
    %c0_i32_0 = arith.constant 0 : i32
    %c0_i32_1 = arith.constant 0 : i32
    return %c0_i32, %c0_i32_0 : i32, i32
  }
  func.func @transform_7(%arg0: i32) -> (i32, i32, i32) {
    %c0_i32 = arith.constant 0 : i32
    %c0_i32_0 = arith.constant 0 : i32
    %c0_i32_1 = arith.constant 0 : i32
    %c0_i32_2 = arith.constant 0 : i32
    return %c0_i32, %c0_i32_0, %c0_i32_1 : i32, i32, i32
  }
  func.func @transform_8(%arg0: i32) -> (i32, i32, i32) {
    %c0_i32 = arith.constant 0 : i32
    %c0_i32_0 = arith.constant 0 : i32
    %c0_i32_1 = arith.constant 0 : i32
    %c0_i32_2 = arith.constant 0 : i32
    return %c0_i32, %c0_i32_0, %c0_i32_1 : i32, i32, i32
  }
  func.func @transform_9(%arg0: i32) -> (i32, i32) {
    %c0_i32 = arith.constant 0 : i32
    %c0_i32_0 = arith.constant 0 : i32
    %c0_i32_1 = arith.constant 0 : i32
    return %c0_i32, %c0_i32_0 : i32, i32
  }
  func.func @transform_10(%arg0: i32) -> (i32, i32) {
    %c0_i32 = arith.constant 0 : i32
    %c0_i32_0 = arith.constant 0 : i32
    return %c0_i32, %arg0 : i32, i32
  }
}

</mosaic_0001>

<llo_original>
// kernel: tpu_custom_call.1
$region0: #{tpu_custom_call.1}
  #allocation0 [shape = 'u32[]', space=smem, size = 0x4, offset = 0x4, fixed_abs, tag = 'smem constant byte address 0x4 - core index']
  #allocation1 [shape = 'u32[144,128]{1,0:T(1,128)}', space=vmem, size = 0x12000, scoped, tag = 'internal scratch']
  #allocation2 [shape = 'f32[1,1]{1,0:T(1,128)S(1)}', space=vmem, size = 0x200, scoped, tag = 'scoped memory for tpu_custom_call.1']
  %s0 = inlined_call_operand.vmem [shape: bf16[14,128], index: 0, kind: input, shape index: {}]
  %s1 = inlined_call_operand.vmem [shape: bf16[32,14], index: 1, kind: input, shape index: {}]
  %s2 = inlined_call_operand.vmem [shape: bf16[3,32,32], index: 2, kind: input, shape index: {}]
  %s3 = inlined_call_operand.vmem [shape: bf16[3,64,32], index: 3, kind: input, shape index: {}]
  %s4 = inlined_call_operand.vmem [shape: bf16[3,32,64], index: 4, kind: input, shape index: {}]
  %s5 = inlined_call_operand.vmem [shape: bf16[1,32], index: 5, kind: input, shape index: {}]
  %s6 = inlined_call_operand.vmem [shape: f32[32,1], index: 6, kind: input, shape index: {}]
  %s7 = inlined_call_operand.vmem [shape: f32[3,128,1], index: 7, kind: input, shape index: {}]
  %s8 = inlined_call_operand.vmem [shape: f32[3,64,1], index: 8, kind: input, shape index: {}]
  %s9 = inlined_call_operand.<no memory space> [shape: f32[1,1], index: 9, kind: input, shape index: {}]
  %s10 = inlined_call_operand.hbm [shape: f32[1,128], index: 10, kind: output, shape index: {}]
  %s11 = sld [smem:[#allocation0]]
  $region50: #{tpu_custom_call.1} parent=0
    _
  %s13 = ssub.s32 1, %s11
  %s14 = scalar_select 0, %s13, %s11
  %v15 = vstv %s9
  %16 = vst [vmem:[#allocation2] sm:$0x1] %v15
  $region1: #{tpu_custom_call.1} parent=0
    #allocation3 [shape = 'u8[512]{0}', space=vmem, size = 0x400, scoped, tag = 'output window, operand 0, single buffered']
    #allocation4 [shape = 's32[1]{0}', space=sflag, size = 0x4, scoped, tag = 'scoped memory for tpu_custom_call.1']
    %17 = vsyncpa [#allocation4], 0
    // Predicated region
    $region2: #{tpu_custom_call.1} parent=1 // pred_check
      _
    $region3: #{tpu_custom_call.1} parent=1 // pred_check_branch
      %19 = sbr.rel (0) target = $region5
    $region4: #{tpu_custom_call.1} parent=1 // pred_region
      _
    $region5: #{tpu_custom_call.1} parent=1 // pred_fallthru
      _
    // Predicated region
    $region6: #{tpu_custom_call.1} parent=1 // pred_check
      _
    $region7: #{tpu_custom_call.1} parent=1 // pred_check_branch
      %21 = sbr.rel (0) target = $region9
    $region8: #{tpu_custom_call.1} parent=1 // pred_region
      _
    $region9: #{tpu_custom_call.1} parent=1 // pred_fallthru
      _
    // Predicated region
    $region10: #{tpu_custom_call.1} parent=1 // pred_check
      _
    $region11: #{tpu_custom_call.1} parent=1 // pred_check_branch
      %23 = sbr.rel (0) target = $region13
    $region12: #{tpu_custom_call.1} parent=1 // pred_region
      _
    $region13: #{tpu_custom_call.1} parent=1 // pred_fallthru
      _
    // Predicated region
    $region14: #{tpu_custom_call.1} parent=1 // pred_check
      _
    $region15: #{tpu_custom_call.1} parent=1 // pred_check_branch
      %25 = sbr.rel (0) target = $region17
    $region16: #{tpu_custom_call.1} parent=1 // pred_region
      _
    $region17: #{tpu_custom_call.1} parent=1 // pred_fallthru
      _
    // Predicated region
    $region18: #{tpu_custom_call.1} parent=1 // pred_check
      _
    $region19: #{tpu_custom_call.1} parent=1 // pred_check_branch
      %27 = sbr.rel (0) target = $region21
    $region20: #{tpu_custom_call.1} parent=1 // pred_region
      _
    $region21: #{tpu_custom_call.1} parent=1 // pred_fallthru
      _
    // Predicated region
    $region22: #{tpu_custom_call.1} parent=1 // pred_check
      _
    $region23: #{tpu_custom_call.1} parent=1 // pred_check_branch
      %29 = sbr.rel (0) target = $region25
    $region24: #{tpu_custom_call.1} parent=1 // pred_region
      _
    $region25: #{tpu_custom_call.1} parent=1 // pred_fallthru
      _
    // Predicated region
    $region26: #{tpu_custom_call.1} parent=1 // pred_check
      _
    $region27: #{tpu_custom_call.1} parent=1 // pred_check_branch
      %31 = sbr.rel (0) target = $region29
    $region28: #{tpu_custom_call.1} parent=1 // pred_region
      _
    $region29: #{tpu_custom_call.1} parent=1 // pred_fallthru
      _
    // Predicated region
    $region30: #{tpu_custom_call.1} parent=1 // pred_check
      _
    $region31: #{tpu_custom_call.1} parent=1 // pred_check_branch
      %33 = sbr.rel (0) target = $region33
    $region32: #{tpu_custom_call.1} parent=1 // pred_region
      _
    $region33: #{tpu_custom_call.1} parent=1 // pred_fallthru
      _
    // Predicated region
    $region34: #{tpu_custom_call.1} parent=1 // pred_check
      _
    $region35: #{tpu_custom_call.1} parent=1 // pred_check_branch
      %35 = sbr.rel (0) target = $region37
    $region36: #{tpu_custom_call.1} parent=1 // pred_region
      _
    $region37: #{tpu_custom_call.1} parent=1 // pred_fallthru
      _
    // Predicated region
    $region38: #{tpu_custom_call.1} parent=1 // pred_check
      _
    $region39: #{tpu_custom_call.1} parent=1 // pred_check_branch
      %37 = sbr.rel (0) target = $region41
    $region40: #{tpu_custom_call.1} parent=1 // pred_region
      _
    $region41: #{tpu_custom_call.1} parent=1 // pred_fallthru
      _
    %v39 = vld [vmem:[%s0] sm:$0xf]
    %v40 = vld [vmem:[%s0 + $0x4] sm:$0x7]
    %v41 = vld [vmem:[%s1] sm:$0xf]
    %v42 = vld [vmem:[%s1 + $0x4] sm:$0xf]
    %v43 = vld [vmem:[%s1 + $0x8] sm:$0xf]
    %v44 = vld [vmem:[%s1 + $0xc] sm:$0xf]
    %v45 = vld [vmem:[%s6] sm:$0xff]
    %v46 = vld [vmem:[%s6 + $0x8] sm:$0xff]
    %v47 = vld [vmem:[%s6 + $0x10] sm:$0xff]
    %v48 = vld [vmem:[%s6 + $0x18] sm:$0xff]
    %50 = vset.pattern.permute.xlu0 0
    %51 = vperm.xlu0 %50, %v45
    %v52 = vpop.permute.xlu0 %51
    %55 = vset.pattern.permute.xlu0 0
    %56 = vperm.xlu0 %55, %v46
    %v57 = vpop.permute.xlu0 %56
    %60 = vset.pattern.permute.xlu0 0
    %61 = vperm.xlu0 %60, %v47
    %v62 = vpop.permute.xlu0 %61
    %65 = vset.pattern.permute.xlu0 0
    %66 = vperm.xlu0 %65, %v48
    %v67 = vpop.permute.xlu0 %66
    %v73 = vunpack.c.l.b16 %v41
    %v74 = vunpack.c.l.b16 %v42
    %v75 = vunpack.c.l.b16 %v43
    %v76 = vunpack.c.l.b16 %v44
    %v77 = vpack.c.b16 %v74, %v73
    %v78 = vpack.c.b16 %v76, %v75
    %v81 = vunpack.c.l.b16 %v39
    %v82 = vunpack.c.l.b16 %v40
    %v83 = vpack.c.b16 %v82, %v81
    %vm84 = vcmask 113664
    %v86 = vsel %vm84, %v77, 0
    %v89 = vsel %vm84, %v78, 0
    %vm91 = vcmask 1046528
    %v93 = vsel %vm91, %v83, 0
    %95 = vmatprep.subr.bf16.mxu0 0
    %96 = vmatpush1.bf16.msra.mxu0 %v93
    %97 = vmatprep.subr.bf16.mxu0 0
    %98 = vmatpush1.bf16.msra.mxu0 0
    %99 = vmatprep.subr.bf16.mxu0 0
    %100 = vmatpush1.bf16.msra.mxu0 0
    %101 = vmatprep.subr.bf16.mxu0 0
    %102 = vmatpush1.bf16.msra.mxu0 0
    %103 = vmatprep.subr.bf16.mxu0 0
    %104 = vmatpush1.bf16.msra.mxu0 0
    %105 = vmatprep.subr.bf16.mxu0 0
    %106 = vmatpush1.bf16.msra.mxu0 0
    %107 = vmatprep.subr.bf16.mxu0 0
    %108 = vmatpush1.bf16.msra.mxu0 0
    %109 = vmatprep.subr.bf16.mxu0 0
    %110 = vmatpush1.bf16.msra.mxu0 0
    %111 = vmatprep.subr.bf16.mxu0 0
    %112 = vmatpush1.bf16.msra.mxu0 0
    %113 = vmatprep.subr.bf16.mxu0 0
    %114 = vmatpush1.bf16.msra.mxu0 0
    %115 = vmatprep.subr.bf16.mxu0 0
    %116 = vmatpush1.bf16.msra.mxu0 0
    %117 = vmatprep.subr.bf16.mxu0 0
    %118 = vmatpush1.bf16.msra.mxu0 0
    %119 = vmatprep.subr.bf16.mxu0 0
    %120 = vmatpush1.bf16.msra.mxu0 0
    %121 = vmatprep.subr.bf16.mxu0 0
    %122 = vmatpush1.bf16.msra.mxu0 0
    %123 = vmatprep.subr.bf16.mxu0 0
    %124 = vmatpush1.bf16.msra.mxu0 0
    %125 = vmatprep.subr.bf16.mxu0 0
    %126 = vmatpush1.bf16.msra.mxu0 0
    %127 = vmatprep.mubr.bf16.mxu0 0
    %128 = vmatmul.mubr.bf16.gmra.mrb[0].mxu0 %v86
    %v129 = vpop.f32.mrb[0].mxu0
    %v130 = vadd.f32 %v52, %v129
    %v131 = vpop.f32.mrb[0].mxu0
    %v132 = vpop.f32.mrb[0].mxu0
    %v133 = vadd.f32 %v57, %v132
    %v134 = vpop.f32.mrb[0].mxu0
    %135 = vmatprep.mubr.bf16.mxu0 0
    %136 = vmatmul.mubr.bf16.gmra.mrb[0].mxu0 %v89
    %v137 = vpop.f32.mrb[0].mxu0
    %v138 = vadd.f32 %v62, %v137
    %v139 = vpop.f32.mrb[0].mxu0
    %v140 = vpop.f32.mrb[0].mxu0
    %v141 = vadd.f32 %v67, %v140
    %v142 = vpop.f32.mrb[0].mxu0
    %143 = vdwg.mxu0
    %v144 = vld [vmem:[%s7] sm:$0xff]
    %v145 = vld [vmem:[%s7 + $0x8] sm:$0xff]
    %v146 = vld [vmem:[%s7 + $0x10] sm:$0xff]
    %v147 = vld [vmem:[%s7 + $0x18] sm:$0xff]
    %v148 = vld [vmem:[%s7 + $0x20] sm:$0xff]
    %v149 = vld [vmem:[%s7 + $0x28] sm:$0xff]
    %v150 = vld [vmem:[%s7 + $0x30] sm:$0xff]
    %v151 = vld [vmem:[%s7 + $0x38] sm:$0xff]
    %v152 = vld [vmem:[%s7 + $0x40] sm:$0xff]
    %v153 = vld [vmem:[%s7 + $0x48] sm:$0xff]
    %v154 = vld [vmem:[%s7 + $0x50] sm:$0xff]
    %v155 = vld [vmem:[%s7 + $0x58] sm:$0xff]
    %v156 = vld [vmem:[%s7 + $0x60] sm:$0xff]
    %v157 = vld [vmem:[%s7 + $0x68] sm:$0xff]
    %v158 = vld [vmem:[%s7 + $0x70] sm:$0xff]
    %v159 = vld [vmem:[%s7 + $0x78] sm:$0xff]
    %v160 = vld [vmem:[%s2] sm:$0xf]
    %v161 = vld [vmem:[%s2 + $0x4] sm:$0xf]
    %v162 = vld [vmem:[%s2 + $0x8] sm:$0xf]
    %v163 = vld [vmem:[%s2 + $0xc] sm:$0xf]
    %v164 = vpack.c.bf16 %v133, %v130
    %v165 = vpack.c.bf16 %v141, %v138
    %167 = vset.pattern.permute.xlu0 0
    %168 = vperm.xlu0 %167, %v144
    %v169 = vpop.permute.xlu0 %168
    %172 = vset.pattern.permute.xlu0 0
    %173 = vperm.xlu0 %172, %v145
    %v174 = vpop.permute.xlu0 %173
    %177 = vset.pattern.permute.xlu0 0
    %178 = vperm.xlu0 %177, %v146
    %v179 = vpop.permute.xlu0 %178
    %182 = vset.pattern.permute.xlu0 0
    %183 = vperm.xlu0 %182, %v147
    %v184 = vpop.permute.xlu0 %183
    %v190 = vunpack.c.l.b16 %v160
    %v191 = vunpack.c.l.b16 %v161
    %v192 = vunpack.c.l.b16 %v162
    %v193 = vunpack.c.l.b16 %v163
    %v194 = vpack.c.b16 %v191, %v190
    %v195 = vpack.c.b16 %v193, %v192
    %vm196 = vcmask 261120
    %v198 = vsel %vm196, %v194, 0
    %v201 = vsel %vm196, %v195, 0
    %203 = vmatprep.subr.bf16.mxu0 0
    %204 = vmatpush1.bf16.msra.mxu0 %v164
    %205 = vmatprep.subr.bf16.mxu0 0
    %206 = vmatpush1.bf16.msra.mxu0 %v165
    %207 = vmatprep.subr.bf16.mxu0 0
    %208 = vmatpush1.bf16.msra.mxu0 0
    %209 = vmatprep.subr.bf16.mxu0 0
    %210 = vmatpush1.bf16.msra.mxu0 0
    %211 = vmatprep.subr.bf16.mxu0 0
    %212 = vmatpush1.bf16.msra.mxu0 0
    %213 = vmatprep.subr.bf16.mxu0 0
    %214 = vmatpush1.bf16.msra.mxu0 0
    %215 = vmatprep.subr.bf16.mxu0 0
    %216 = vmatpush1.bf16.msra.mxu0 0
    %217 = vmatprep.subr.bf16.mxu0 0
    %218 = vmatpush1.bf16.msra.mxu0 0
    %219 = vmatprep.subr.bf16.mxu0 0
    %220 = vmatpush1.bf16.msra.mxu0 0
    %221 = vmatprep.subr.bf16.mxu0 0
    %222 = vmatpush1.bf16.msra.mxu0 0
    %223 = vmatprep.subr.bf16.mxu0 0
    %224 = vmatpush1.bf16.msra.mxu0 0
    %225 = vmatprep.subr.bf16.mxu0 0
    %226 = vmatpush1.bf16.msra.mxu0 0
    %227 = vmatprep.subr.bf16.mxu0 0
    %228 = vmatpush1.bf16.msra.mxu0 0
    %229 = vmatprep.subr.bf16.mxu0 0
    %230 = vmatpush1.bf16.msra.mxu0 0
    %231 = vmatprep.subr.bf16.mxu0 0
    %232 = vmatpush1.bf16.msra.mxu0 0
    %233 = vmatprep.subr.bf16.mxu0 0
    %234 = vmatpush1.bf16.msra.mxu0 0
    %235 = vmatprep.mubr.bf16.mxu0 0
    %236 = vmatmul.mubr.bf16.gmra.mrb[0].mxu0 %v198
    %v237 = vpop.f32.mrb[0].mxu0
    %v238 = vadd.f32 %v169, %v237
    %v239 = vpop.f32.mrb[0].mxu0
    %v240 = vpop.f32.mrb[0].mxu0
    %v241 = vadd.f32 %v174, %v240
    %v242 = vpop.f32.mrb[0].mxu0
    %243 = vmatprep.mubr.bf16.mxu0 0
    %244 = vmatmul.mubr.bf16.gmra.mrb[0].mxu0 %v201
    %v245 = vpop.f32.mrb[0].mxu0
    %v246 = vadd.f32 %v179, %v245
    %v247 = vpop.f32.mrb[0].mxu0
    %v248 = vpop.f32.mrb[0].mxu0
    %v249 = vadd.f32 %v184, %v248
    %v250 = vpop.f32.mrb[0].mxu0
    %251 = vdwg.mxu0
    %v252 = vadd.f32 %v238, %v241
    %v253 = vadd.f32 %v252, %v246
    %v254 = vadd.f32 %v253, %v249
    %v255 = vrot.slane %v254, 4
    %v256 = vadd.f32 %v254, %v255
    %v257 = vrot.slane %v256, 2
    %v258 = vadd.f32 %v256, %v257
    %v259 = vrot.slane %v258, 1
    %v260 = vadd.f32 %v258, %v259
    %v261 = vrcp.pop 32.0
    %v262 = vmul.f32 %v260, %v261
    %v263 = vmul.f32 %v238, %v238
    %v264 = vmul.f32 %v241, %v241
    %v265 = vmul.f32 %v246, %v246
    %v266 = vmul.f32 %v249, %v249
    %v267 = vadd.f32 %v263, %v264
    %v268 = vadd.f32 %v267, %v265
    %v269 = vadd.f32 %v268, %v266
    %v270 = vrot.slane %v269, 4
    %v271 = vadd.f32 %v269, %v270
    %v272 = vrot.slane %v271, 2
    %v273 = vadd.f32 %v271, %v272
    %v274 = vrot.slane %v273, 1
    %v275 = vadd.f32 %v273, %v274
    %v276 = vmul.f32 %v275, %v261
    %v277 = vmul.f32 %v262, %v262
    %v278 = vsub.f32 %v276, %v277
    %v279 = vsub.f32 %v238, %v262
    %v280 = vsub.f32 %v241, %v262
    %v281 = vsub.f32 %v246, %v262
    %v282 = vsub.f32 %v249, %v262
    %v283 = vadd.f32 %v278, 1e-05
    %v284 = vrsqrt.pop %v283
    %v285 = vmul.f32 %v279, %v284
    %v286 = vmul.f32 %v280, %v284
    %v287 = vmul.f32 %v281, %v284
    %v288 = vmul.f32 %v282, %v284
    %290 = vset.pattern.permute.xlu0 0
    %291 = vperm.xlu0 %290, %v148
    %v292 = vpop.permute.xlu0 %291
    %295 = vset.pattern.permute.xlu0 0
    %296 = vperm.xlu0 %295, %v149
    %v297 = vpop.permute.xlu0 %296
    %300 = vset.pattern.permute.xlu0 0
    %301 = vperm.xlu0 %300, %v150
    %v302 = vpop.permute.xlu0 %301
    %305 = vset.pattern.permute.xlu0 0
    %306 = vperm.xlu0 %305, %v151
    %v307 = vpop.permute.xlu0 %306
    %v309 = vmul.f32 %v285, %v292
    %v310 = vmul.f32 %v286, %v297
    %v311 = vmul.f32 %v287, %v302
    %v312 = vmul.f32 %v288, %v307
    %314 = vset.pattern.permute.xlu0 0
    %315 = vperm.xlu0 %314, %v152
    %v316 = vpop.permute.xlu0 %315
    %319 = vset.pattern.permute.xlu0 0
    %320 = vperm.xlu0 %319, %v153
    %v321 = vpop.permute.xlu0 %320
    %324 = vset.pattern.permute.xlu0 0
    %325 = vperm.xlu0 %324, %v154
    %v326 = vpop.permute.xlu0 %325
    %329 = vset.pattern.permute.xlu0 0
    %330 = vperm.xlu0 %329, %v155
    %v331 = vpop.permute.xlu0 %330
    %v333 = vadd.f32 %v309, %v316
    %v334 = vadd.f32 %v310, %v321
    %v335 = vadd.f32 %v311, %v326
    %v336 = vadd.f32 %v312, %v331
    %v337 = vld [vmem:[%s3] sm:$0xf]
    %v338 = vld [vmem:[%s3 + $0x4] sm:$0xf]
    %v339 = vld [vmem:[%s3 + $0x8] sm:$0xf]
    %v340 = vld [vmem:[%s3 + $0xc] sm:$0xf]
    %v341 = vld [vmem:[%s3 + $0x10] sm:$0xf]
    %v342 = vld [vmem:[%s3 + $0x14] sm:$0xf]
    %v343 = vld [vmem:[%s3 + $0x18] sm:$0xf]
    %v344 = vld [vmem:[%s3 + $0x1c] sm:$0xf]
    %v345 = vpack.c.bf16 %v334, %v333
    %v346 = vpack.c.bf16 %v336, %v335
    %v347 = vld [vmem:[%s8] sm:$0xff]
    %v348 = vld [vmem:[%s8 + $0x8] sm:$0xff]
    %v349 = vld [vmem:[%s8 + $0x10] sm:$0xff]
    %v350 = vld [vmem:[%s8 + $0x18] sm:$0xff]
    %v351 = vld [vmem:[%s8 + $0x20] sm:$0xff]
    %v352 = vld [vmem:[%s8 + $0x28] sm:$0xff]
    %v353 = vld [vmem:[%s8 + $0x30] sm:$0xff]
    %v354 = vld [vmem:[%s8 + $0x38] sm:$0xff]
    %356 = vset.pattern.permute.xlu0 0
    %357 = vperm.xlu0 %356, %v347
    %v358 = vpop.permute.xlu0 %357
    %361 = vset.pattern.permute.xlu0 0
    %362 = vperm.xlu0 %361, %v348
    %v363 = vpop.permute.xlu0 %362
    %366 = vset.pattern.permute.xlu0 0
    %367 = vperm.xlu0 %366, %v349
    %v368 = vpop.permute.xlu0 %367
    %371 = vset.pattern.permute.xlu0 0
    %372 = vperm.xlu0 %371, %v350
    %v373 = vpop.permute.xlu0 %372
    %376 = vset.pattern.permute.xlu0 0
    %377 = vperm.xlu0 %376, %v351
    %v378 = vpop.permute.xlu0 %377
    %381 = vset.pattern.permute.xlu0 0
    %382 = vperm.xlu0 %381, %v352
    %v383 = vpop.permute.xlu0 %382
    %386 = vset.pattern.permute.xlu0 0
    %387 = vperm.xlu0 %386, %v353
    %v388 = vpop.permute.xlu0 %387
    %391 = vset.pattern.permute.xlu0 0
    %392 = vperm.xlu0 %391, %v354
    %v393 = vpop.permute.xlu0 %392
    %v403 = vunpack.c.l.b16 %v337
    %v404 = vunpack.c.l.b16 %v338
    %v405 = vunpack.c.l.b16 %v339
    %v406 = vunpack.c.l.b16 %v340
    %v407 = vunpack.c.l.b16 %v341
    %v408 = vunpack.c.l.b16 %v342
    %v409 = vunpack.c.l.b16 %v343
    %v410 = vunpack.c.l.b16 %v344
    %v411 = vpack.c.b16 %v404, %v403
    %v412 = vpack.c.b16 %v406, %v405
    %v413 = vpack.c.b16 %v408, %v407
    %v414 = vpack.c.b16 %v410, %v409
    %v416 = vsel %vm196, %v411, 0
    %v419 = vsel %vm196, %v412, 0
    %v422 = vsel %vm196, %v413, 0
    %v425 = vsel %vm196, %v414, 0
    %427 = vmatprep.subr.bf16.mxu0 0
    %428 = vmatpush1.bf16.msra.mxu0 %v345
    %429 = vmatprep.subr.bf16.mxu0 0
    %430 = vmatpush1.bf16.msra.mxu0 %v346
    %431 = vmatprep.subr.bf16.mxu0 0
    %432 = vmatpush1.bf16.msra.mxu0 0
    %433 = vmatprep.subr.bf16.mxu0 0
    %434 = vmatpush1.bf16.msra.mxu0 0
    %435 = vmatprep.subr.bf16.mxu0 0
    %436 = vmatpush1.bf16.msra.mxu0 0
    %437 = vmatprep.subr.bf16.mxu0 0
    %438 = vmatpush1.bf16.msra.mxu0 0
    %439 = vmatprep.subr.bf16.mxu0 0
    %440 = vmatpush1.bf16.msra.mxu0 0
    %441 = vmatprep.subr.bf16.mxu0 0
    %442 = vmatpush1.bf16.msra.mxu0 0
    %443 = vmatprep.subr.bf16.mxu0 0
    %444 = vmatpush1.bf16.msra.mxu0 0
    %445 = vmatprep.subr.bf16.mxu0 0
    %446 = vmatpush1.bf16.msra.mxu0 0
    %447 = vmatprep.subr.bf16.mxu0 0
    %448 = vmatpush1.bf16.msra.mxu0 0
    %449 = vmatprep.subr.bf16.mxu0 0
    %450 = vmatpush1.bf16.msra.mxu0 0
    %451 = vmatprep.subr.bf16.mxu0 0
    %452 = vmatpush1.bf16.msra.mxu0 0
    %453 = vmatprep.subr.bf16.mxu0 0
    %454 = vmatpush1.bf16.msra.mxu0 0
    %455 = vmatprep.subr.bf16.mxu0 0
    %456 = vmatpush1.bf16.msra.mxu0 0
    %457 = vmatprep.subr.bf16.mxu0 0
    %458 = vmatpush1.bf16.msra.mxu0 0
    %459 = vmatprep.mubr.bf16.mxu0 0
    %460 = vmatmul.mubr.bf16.gmra.mrb[0].mxu0 %v416
    %v461 = vpop.f32.mrb[0].mxu0
    %v462 = vadd.f32 %v358, %v461
    %v463 = vpop.f32.mrb[0].mxu0
    %v464 = vpop.f32.mrb[0].mxu0
    %v465 = vadd.f32 %v363, %v464
    %v466 = vpop.f32.mrb[0].mxu0
    %467 = vmatprep.mubr.bf16.mxu0 0
    %468 = vmatmul.mubr.bf16.gmra.mrb[0].mxu0 %v419
    %v469 = vpop.f32.mrb[0].mxu0
    %v470 = vadd.f32 %v368, %v469
    %v471 = vpop.f32.mrb[0].mxu0
    %v472 = vpop.f32.mrb[0].mxu0
    %v473 = vadd.f32 %v373, %v472
    %v474 = vpop.f32.mrb[0].mxu0
    %475 = vmatprep.mubr.bf16.mxu0 0
    %476 = vmatmul.mubr.bf16.gmra.mrb[0].mxu0 %v422
    %v477 = vpop.f32.mrb[0].mxu0
    %v478 = vadd.f32 %v378, %v477
    %v479 = vpop.f32.mrb[0].mxu0
    %v480 = vpop.f32.mrb[0].mxu0
    %v481 = vadd.f32 %v383, %v480
    %v482 = vpop.f32.mrb[0].mxu0
    %483 = vmatprep.mubr.bf16.mxu0 0
    %484 = vmatmul.mubr.bf16.gmra.mrb[0].mxu0 %v425
    %v485 = vpop.f32.mrb[0].mxu0
    %v486 = vadd.f32 %v388, %v485
    %v487 = vpop.f32.mrb[0].mxu0
    %v488 = vpop.f32.mrb[0].mxu0
    %v489 = vadd.f32 %v393, %v488
    %v490 = vpop.f32.mrb[0].mxu0
    %491 = vdwg.mxu0
    %v492 = vmax.f32 %v462, 0.0
    %v493 = vmax.f32 %v465, 0.0
    %v494 = vmax.f32 %v470, 0.0
    %v495 = vmax.f32 %v473, 0.0
    %v496 = vmax.f32 %v478, 0.0
    %v497 = vmax.f32 %v481, 0.0
    %v498 = vmax.f32 %v486, 0.0
    %v499 = vmax.f32 %v489, 0.0
    %v500 = vld [vmem:[%s4] sm:$0xf]
    %v501 = vld [vmem:[%s4 + $0x4] sm:$0xf]
    %v502 = vld [vmem:[%s4 + $0x8] sm:$0xf]
    %v503 = vld [vmem:[%s4 + $0xc] sm:$0xf]
    %v504 = vpack.c.bf16 %v493, %v492
    %v505 = vpack.c.bf16 %v495, %v494
    %v506 = vpack.c.bf16 %v497, %v496
    %v507 = vpack.c.bf16 %v499, %v498
    %509 = vset.pattern.permute.xlu0 0
    %510 = vperm.xlu0 %509, %v156
    %v511 = vpop.permute.xlu0 %510
    %514 = vset.pattern.permute.xlu0 0
    %515 = vperm.xlu0 %514, %v157
    %v516 = vpop.permute.xlu0 %515
    %519 = vset.pattern.permute.xlu0 0
    %520 = vperm.xlu0 %519, %v158
    %v521 = vpop.permute.xlu0 %520
    %524 = vset.pattern.permute.xlu0 0
    %525 = vperm.xlu0 %524, %v159
    %v526 = vpop.permute.xlu0 %525
    %v532 = vunpack.c.l.b16 %v500
    %v533 = vunpack.c.l.b16 %v501
    %v534 = vunpack.c.l.b16 %v502
    %v535 = vunpack.c.l.b16 %v503
    %v536 = vpack.c.b16 %v533, %v532
    %v537 = vpack.c.b16 %v535, %v534
    %vm538 = vcmask 523264
    %v540 = vsel %vm538, %v536, 0
    %v543 = vsel %vm538, %v537, 0
    %545 = vmatprep.subr.bf16.mxu0 0
    %546 = vmatpush1.bf16.msra.mxu0 %v504
    %547 = vmatprep.subr.bf16.mxu0 0
    %548 = vmatpush1.bf16.msra.mxu0 %v505
    %549 = vmatprep.subr.bf16.mxu0 0
    %550 = vmatpush1.bf16.msra.mxu0 %v506
    %551 = vmatprep.subr.bf16.mxu0 0
    %552 = vmatpush1.bf16.msra.mxu0 %v507
    %553 = vmatprep.subr.bf16.mxu0 0
    %554 = vmatpush1.bf16.msra.mxu0 0
    %555 = vmatprep.subr.bf16.mxu0 0
    %556 = vmatpush1.bf16.msra.mxu0 0
    %557 = vmatprep.subr.bf16.mxu0 0
    %558 = vmatpush1.bf16.msra.mxu0 0
    %559 = vmatprep.subr.bf16.mxu0 0
    %560 = vmatpush1.bf16.msra.mxu0 0
    %561 = vmatprep.subr.bf16.mxu0 0
    %562 = vmatpush1.bf16.msra.mxu0 0
    %563 = vmatprep.subr.bf16.mxu0 0
    %564 = vmatpush1.bf16.msra.mxu0 0
    %565 = vmatprep.subr.bf16.mxu0 0
    %566 = vmatpush1.bf16.msra.mxu0 0
    %567 = vmatprep.subr.bf16.mxu0 0
    %568 = vmatpush1.bf16.msra.mxu0 0
    %569 = vmatprep.subr.bf16.mxu0 0
    %570 = vmatpush1.bf16.msra.mxu0 0
    %571 = vmatprep.subr.bf16.mxu0 0
    %572 = vmatpush1.bf16.msra.mxu0 0
    %573 = vmatprep.subr.bf16.mxu0 0
    %574 = vmatpush1.bf16.msra.mxu0 0
    %575 = vmatprep.subr.bf16.mxu0 0
    %576 = vmatpush1.bf16.msra.mxu0 0
    %577 = vmatprep.mubr.bf16.mxu0 0
    %578 = vmatmul.mubr.bf16.gmra.mrb[0].mxu0 %v540
    %v579 = vpop.f32.mrb[0].mxu0
    %v580 = vadd.f32 %v511, %v579
    %v581 = vpop.f32.mrb[0].mxu0
    %v582 = vpop.f32.mrb[0].mxu0
    %v583 = vadd.f32 %v516, %v582
    %v584 = vpop.f32.mrb[0].mxu0
    %585 = vmatprep.mubr.bf16.mxu0 0
    %586 = vmatmul.mubr.bf16.gmra.mrb[0].mxu0 %v543
    %v587 = vpop.f32.mrb[0].mxu0
    %v588 = vadd.f32 %v521, %v587
    %v589 = vpop.f32.mrb[0].mxu0
    %v590 = vpop.f32.mrb[0].mxu0
    %v591 = vadd.f32 %v526, %v590
    %v592 = vpop.f32.mrb[0].mxu0
    %593 = vdwg.mxu0
    %v594 = vadd.f32 %v333, %v580
    %v595 = vadd.f32 %v334, %v583
    %v596 = vadd.f32 %v335, %v588
    %v597 = vadd.f32 %v336, %v591
    %v598 = vadd.f32 %v594, %v595
    %v599 = vadd.f32 %v598, %v596
    %v600 = vadd.f32 %v599, %v597
    %v601 = vrot.slane %v600, 4
    %v602 = vadd.f32 %v600, %v601
    %v603 = vrot.slane %v602, 2
    %v604 = vadd.f32 %v602, %v603
    %v605 = vrot.slane %v604, 1
    %v606 = vadd.f32 %v604, %v605
    %v607 = vmul.f32 %v606, %v261
    %v608 = vmul.f32 %v594, %v594
    %v609 = vmul.f32 %v595, %v595
    %v610 = vmul.f32 %v596, %v596
    %v611 = vmul.f32 %v597, %v597
    %v612 = vadd.f32 %v608, %v609
    %v613 = vadd.f32 %v612, %v610
    %v614 = vadd.f32 %v613, %v611
    %v615 = vrot.slane %v614, 4
    %v616 = vadd.f32 %v614, %v615
    %v617 = vrot.slane %v616, 2
    %v618 = vadd.f32 %v616, %v617
    %v619 = vrot.slane %v618, 1
    %v620 = vadd.f32 %v618, %v619
    %v621 = vmul.f32 %v620, %v261
    %v622 = vmul.f32 %v607, %v607
    %v623 = vsub.f32 %v621, %v622
    %v624 = vsub.f32 %v594, %v607
    %v625 = vsub.f32 %v595, %v607
    %v626 = vsub.f32 %v596, %v607
    %v627 = vsub.f32 %v597, %v607
    %v628 = vadd.f32 %v623, 1e-05
    %v629 = vrsqrt.pop %v628
    %v630 = vmul.f32 %v624, %v629
    %v631 = vmul.f32 %v625, %v629
    %v632 = vmul.f32 %v626, %v629
    %v633 = vmul.f32 %v627, %v629
    %s634 = scalar_lea.vmem %s7, 128
    %v635 = vld [vmem:[%s634] sm:$0xff]
    %v636 = vld [vmem:[%s634 + $0x8] sm:$0xff]
    %v637 = vld [vmem:[%s634 + $0x10] sm:$0xff]
    %v638 = vld [vmem:[%s634 + $0x18] sm:$0xff]
    %v639 = vld [vmem:[%s634 + $0x20] sm:$0xff]
    %v640 = vld [vmem:[%s634 + $0x28] sm:$0xff]
    %v641 = vld [vmem:[%s634 + $0x30] sm:$0xff]
    %v642 = vld [vmem:[%s634 + $0x38] sm:$0xff]
    %v643 = vld [vmem:[%s634 + $0x40] sm:$0xff]
    %v644 = vld [vmem:[%s634 + $0x48] sm:$0xff]
    %v645 = vld [vmem:[%s634 + $0x50] sm:$0xff]
    %v646 = vld [vmem:[%s634 + $0x58] sm:$0xff]
    %v647 = vld [vmem:[%s634 + $0x60] sm:$0xff]
    %v648 = vld [vmem:[%s634 + $0x68] sm:$0xff]
    %v649 = vld [vmem:[%s634 + $0x70] sm:$0xff]
    %v650 = vld [vmem:[%s634 + $0x78] sm:$0xff]
    %s651 = scalar_lea.vmem %s2, 16
    %v652 = vld [vmem:[%s651] sm:$0xf]
    %v653 = vld [vmem:[%s651 + $0x4] sm:$0xf]
    %v654 = vld [vmem:[%s651 + $0x8] sm:$0xf]
    %v655 = vld [vmem:[%s651 + $0xc] sm:$0xf]
    %v656 = vpack.c.bf16 %v631, %v630
    %v657 = vpack.c.bf16 %v633, %v632
    %659 = vset.pattern.permute.xlu0 0
    %660 = vperm.xlu0 %659, %v635
    %v661 = vpop.permute.xlu0 %660
    %664 = vset.pattern.permute.xlu0 0
    %665 = vperm.xlu0 %664, %v636
    %v666 = vpop.permute.xlu0 %665
    %669 = vset.pattern.permute.xlu0 0
    %670 = vperm.xlu0 %669, %v637
    %v671 = vpop.permute.xlu0 %670
    %674 = vset.pattern.permute.xlu0 0
    %675 = vperm.xlu0 %674, %v638
    %v676 = vpop.permute.xlu0 %675
    %v682 = vunpack.c.l.b16 %v652
    %v683 = vunpack.c.l.b16 %v653
    %v684 = vunpack.c.l.b16 %v654
    %v685 = vunpack.c.l.b16 %v655
    %v686 = vpack.c.b16 %v683, %v682
    %v687 = vpack.c.b16 %v685, %v684
    %v689 = vsel %vm196, %v686, 0
    %v692 = vsel %vm196, %v687, 0
    %694 = vmatprep.subr.bf16.mxu0 0
    %695 = vmatpush1.bf16.msra.mxu0 %v656
    %696 = vmatprep.subr.bf16.mxu0 0
    %697 = vmatpush1.bf16.msra.mxu0 %v657
    %698 = vmatprep.subr.bf16.mxu0 0
    %699 = vmatpush1.bf16.msra.mxu0 0
    %700 = vmatprep.subr.bf16.mxu0 0
    %701 = vmatpush1.bf16.msra.mxu0 0
    %702 = vmatprep.subr.bf16.mxu0 0
    %703 = vmatpush1.bf16.msra.mxu0 0
    %704 = vmatprep.subr.bf16.mxu0 0
    %705 = vmatpush1.bf16.msra.mxu0 0
    %706 = vmatprep.subr.bf16.mxu0 0
    %707 = vmatpush1.bf16.msra.mxu0 0
    %708 = vmatprep.subr.bf16.mxu0 0
    %709 = vmatpush1.bf16.msra.mxu0 0
    %710 = vmatprep.subr.bf16.mxu0 0
    %711 = vmatpush1.bf16.msra.mxu0 0
    %712 = vmatprep.subr.bf16.mxu0 0
    %713 = vmatpush1.bf16.msra.mxu0 0
    %714 = vmatprep.subr.bf16.mxu0 0
    %715 = vmatpush1.bf16.msra.mxu0 0
    %716 = vmatprep.subr.bf16.mxu0 0
    %717 = vmatpush1.bf16.msra.mxu0 0
    %718 = vmatprep.subr.bf16.mxu0 0
    %719 = vmatpush1.bf16.msra.mxu0 0
    %720 = vmatprep.subr.bf16.mxu0 0
    %721 = vmatpush1.bf16.msra.mxu0 0
    %722 = vmatprep.subr.bf16.mxu0 0
    %723 = vmatpush1.bf16.msra.mxu0 0
    %724 = vmatprep.subr.bf16.mxu0 0
    %725 = vmatpush1.bf16.msra.mxu0 0
    %726 = vmatprep.mubr.bf16.mxu0 0
    %727 = vmatmul.mubr.bf16.gmra.mrb[0].mxu0 %v689
    %v728 = vpop.f32.mrb[0].mxu0
    %v729 = vadd.f32 %v661, %v728
    %v730 = vpop.f32.mrb[0].mxu0
    %v731 = vpop.f32.mrb[0].mxu0
    %v732 = vadd.f32 %v666, %v731
    %v733 = vpop.f32.mrb[0].mxu0
    %734 = vmatprep.mubr.bf16.mxu0 0
    %735 = vmatmul.mubr.bf16.gmra.mrb[0].mxu0 %v692
    %v736 = vpop.f32.mrb[0].mxu0
    %v737 = vadd.f32 %v671, %v736
    %v738 = vpop.f32.mrb[0].mxu0
    %v739 = vpop.f32.mrb[0].mxu0
    %v740 = vadd.f32 %v676, %v739
    %v741 = vpop.f32.mrb[0].mxu0
    %742 = vdwg.mxu0
    %v743 = vadd.f32 %v729, %v732
    %v744 = vadd.f32 %v743, %v737
    %v745 = vadd.f32 %v744, %v740
    %v746 = vrot.slane %v745, 4
    %v747 = vadd.f32 %v745, %v746
    %v748 = vrot.slane %v747, 2
    %v749 = vadd.f32 %v747, %v748
    %v750 = vrot.slane %v749, 1
    %v751 = vadd.f32 %v749, %v750
    %v752 = vmul.f32 %v751, %v261
    %v753 = vmul.f32 %v729, %v729
    %v754 = vmul.f32 %v732, %v732
    %v755 = vmul.f32 %v737, %v737
    %v756 = vmul.f32 %v740, %v740
    %v757 = vadd.f32 %v753, %v754
    %v758 = vadd.f32 %v757, %v755
    %v759 = vadd.f32 %v758, %v756
    %v760 = vrot.slane %v759, 4
    %v761 = vadd.f32 %v759, %v760
    %v762 = vrot.slane %v761, 2
    %v763 = vadd.f32 %v761, %v762
    %v764 = vrot.slane %v763, 1
    %v765 = vadd.f32 %v763, %v764
    %v766 = vmul.f32 %v765, %v261
    %v767 = vmul.f32 %v752, %v752
    %v768 = vsub.f32 %v766, %v767
    %v769 = vsub.f32 %v729, %v752
    %v770 = vsub.f32 %v732, %v752
    %v771 = vsub.f32 %v737, %v752
    %v772 = vsub.f32 %v740, %v752
    %v773 = vadd.f32 %v768, 1e-05
    %v774 = vrsqrt.pop %v773
    %v775 = vmul.f32 %v769, %v774
    %v776 = vmul.f32 %v770, %v774
    %v777 = vmul.f32 %v771, %v774
    %v778 = vmul.f32 %v772, %v774
    %780 = vset.pattern.permute.xlu0 0
    %781 = vperm.xlu0 %780, %v639
    %v782 = vpop.permute.xlu0 %781
    %785 = vset.pattern.permute.xlu0 0
    %786 = vperm.xlu0 %785, %v640
    %v787 = vpop.permute.xlu0 %786
    %790 = vset.pattern.permute.xlu0 0
    %791 = vperm.xlu0 %790, %v641
    %v792 = vpop.permute.xlu0 %791
    %795 = vset.pattern.permute.xlu0 0
    %796 = vperm.xlu0 %795, %v642
    %v797 = vpop.permute.xlu0 %796
    %v799 = vmul.f32 %v775, %v782
    %v800 = vmul.f32 %v776, %v787
    %v801 = vmul.f32 %v777, %v792
    %v802 = vmul.f32 %v778, %v797
    %804 = vset.pattern.permute.xlu0 0
    %805 = vperm.xlu0 %804, %v643
    %v806 = vpop.permute.xlu0 %805
    %809 = vset.pattern.permute.xlu0 0
    %810 = vperm.xlu0 %809, %v644
    %v811 = vpop.permute.xlu0 %810
    %814 = vset.pattern.permute.xlu0 0
    %815 = vperm.xlu0 %814, %v645
    %v816 = vpop.permute.xlu0 %815
    %819 = vset.pattern.permute.xlu0 0
    %820 = vperm.xlu0 %819, %v646
    %v821 = vpop.permute.xlu0 %820
    %v823 = vadd.f32 %v799, %v806
    %v824 = vadd.f32 %v800, %v811
    %v825 = vadd.f32 %v801, %v816
    %v826 = vadd.f32 %v802, %v821
    %s827 = scalar_lea.vmem %s3, 32
    %v828 = vld [vmem:[%s827] sm:$0xf]
    %v829 = vld [vmem:[%s827 + $0x4] sm:$0xf]
    %v830 = vld [vmem:[%s827 + $0x8] sm:$0xf]
    %v831 = vld [vmem:[%s827 + $0xc] sm:$0xf]
    %v832 = vld [vmem:[%s827 + $0x10] sm:$0xf]
    %v833 = vld [vmem:[%s827 + $0x14] sm:$0xf]
    %v834 = vld [vmem:[%s827 + $0x18] sm:$0xf]
    %v835 = vld [vmem:[%s827 + $0x1c] sm:$0xf]
    %v836 = vpack.c.bf16 %v824, %v823
    %v837 = vpack.c.bf16 %v826, %v825
    %s838 = scalar_lea.vmem %s8, 64
    %v839 = vld [vmem:[%s838] sm:$0xff]
    %v840 = vld [vmem:[%s838 + $0x8] sm:$0xff]
    %v841 = vld [vmem:[%s838 + $0x10] sm:$0xff]
    %v842 = vld [vmem:[%s838 + $0x18] sm:$0xff]
    %v843 = vld [vmem:[%s838 + $0x20] sm:$0xff]
    %v844 = vld [vmem:[%s838 + $0x28] sm:$0xff]
    %v845 = vld [vmem:[%s838 + $0x30] sm:$0xff]
    %v846 = vld [vmem:[%s838 + $0x38] sm:$0xff]
    %848 = vset.pattern.permute.xlu0 0
    %849 = vperm.xlu0 %848, %v839
    %v850 = vpop.permute.xlu0 %849
    %853 = vset.pattern.permute.xlu0 0
    %854 = vperm.xlu0 %853, %v840
    %v855 = vpop.permute.xlu0 %854
    %858 = vset.pattern.permute.xlu0 0
    %859 = vperm.xlu0 %858, %v841
    %v860 = vpop.permute.xlu0 %859
    %863 = vset.pattern.permute.xlu0 0
    %864 = vperm.xlu0 %863, %v842
    %v865 = vpop.permute.xlu0 %864
    %868 = vset.pattern.permute.xlu0 0
    %869 = vperm.xlu0 %868, %v843
    %v870 = vpop.permute.xlu0 %869
    %873 = vset.pattern.permute.xlu0 0
    %874 = vperm.xlu0 %873, %v844
    %v875 = vpop.permute.xlu0 %874
    %878 = vset.pattern.permute.xlu0 0
    %879 = vperm.xlu0 %878, %v845
    %v880 = vpop.permute.xlu0 %879
    %883 = vset.pattern.permute.xlu0 0
    %884 = vperm.xlu0 %883, %v846
    %v885 = vpop.permute.xlu0 %884
    %v895 = vunpack.c.l.b16 %v828
    %v896 = vunpack.c.l.b16 %v829
    %v897 = vunpack.c.l.b16 %v830
    %v898 = vunpack.c.l.b16 %v831
    %v899 = vunpack.c.l.b16 %v832
    %v900 = vunpack.c.l.b16 %v833
    %v901 = vunpack.c.l.b16 %v834
    %v902 = vunpack.c.l.b16 %v835
    %v903 = vpack.c.b16 %v896, %v895
    %v904 = vpack.c.b16 %v898, %v897
    %v905 = vpack.c.b16 %v900, %v899
    %v906 = vpack.c.b16 %v902, %v901
    %v908 = vsel %vm196, %v903, 0
    %v911 = vsel %vm196, %v904, 0
    %v914 = vsel %vm196, %v905, 0
    %v917 = vsel %vm196, %v906, 0
    %919 = vmatprep.subr.bf16.mxu0 0
    %920 = vmatpush1.bf16.msra.mxu0 %v836
    %921 = vmatprep.subr.bf16.mxu0 0
    %922 = vmatpush1.bf16.msra.mxu0 %v837
    %923 = vmatprep.subr.bf16.mxu0 0
    %924 = vmatpush1.bf16.msra.mxu0 0
    %925 = vmatprep.subr.bf16.mxu0 0
    %926 = vmatpush1.bf16.msra.mxu0 0
    %927 = vmatprep.subr.bf16.mxu0 0
    %928 = vmatpush1.bf16.msra.mxu0 0
    %929 = vmatprep.subr.bf16.mxu0 0
    %930 = vmatpush1.bf16.msra.mxu0 0
    %931 = vmatprep.subr.bf16.mxu0 0
    %932 = vmatpush1.bf16.msra.mxu0 0
    %933 = vmatprep.subr.bf16.mxu0 0
    %934 = vmatpush1.bf16.msra.mxu0 0
    %935 = vmatprep.subr.bf16.mxu0 0
    %936 = vmatpush1.bf16.msra.mxu0 0
    %937 = vmatprep.subr.bf16.mxu0 0
    %938 = vmatpush1.bf16.msra.mxu0 0
    %939 = vmatprep.subr.bf16.mxu0 0
    %940 = vmatpush1.bf16.msra.mxu0 0
    %941 = vmatprep.subr.bf16.mxu0 0
    %942 = vmatpush1.bf16.msra.mxu0 0
    %943 = vmatprep.subr.bf16.mxu0 0
    %944 = vmatpush1.bf16.msra.mxu0 0
    %945 = vmatprep.subr.bf16.mxu0 0
    %946 = vmatpush1.bf16.msra.mxu0 0
    %947 = vmatprep.subr.bf16.mxu0 0
    %948 = vmatpush1.bf16.msra.mxu0 0
    %949 = vmatprep.subr.bf16.mxu0 0
    %950 = vmatpush1.bf16.msra.mxu0 0
    %951 = vmatprep.mubr.bf16.mxu0 0
    %952 = vmatmul.mubr.bf16.gmra.mrb[0].mxu0 %v908
    %v953 = vpop.f32.mrb[0].mxu0
    %v954 = vadd.f32 %v850, %v953
    %v955 = vpop.f32.mrb[0].mxu0
    %v956 = vpop.f32.mrb[0].mxu0
    %v957 = vadd.f32 %v855, %v956
    %v958 = vpop.f32.mrb[0].mxu0
    %959 = vmatprep.mubr.bf16.mxu0 0
    %960 = vmatmul.mubr.bf16.gmra.mrb[0].mxu0 %v911
    %v961 = vpop.f32.mrb[0].mxu0
    %v962 = vadd.f32 %v860, %v961
    %v963 = vpop.f32.mrb[0].mxu0
    %v964 = vpop.f32.mrb[0].mxu0
    %v965 = vadd.f32 %v865, %v964
    %v966 = vpop.f32.mrb[0].mxu0
    %967 = vmatprep.mubr.bf16.mxu0 0
    %968 = vmatmul.mubr.bf16.gmra.mrb[0].mxu0 %v914
    %v969 = vpop.f32.mrb[0].mxu0
    %v970 = vadd.f32 %v870, %v969
    %v971 = vpop.f32.mrb[0].mxu0
    %v972 = vpop.f32.mrb[0].mxu0
    %v973 = vadd.f32 %v875, %v972
    %v974 = vpop.f32.mrb[0].mxu0
    %975 = vmatprep.mubr.bf16.mxu0 0
    %976 = vmatmul.mubr.bf16.gmra.mrb[0].mxu0 %v917
    %v977 = vpop.f32.mrb[0].mxu0
    %v978 = vadd.f32 %v880, %v977
    %v979 = vpop.f32.mrb[0].mxu0
    %v980 = vpop.f32.mrb[0].mxu0
    %v981 = vadd.f32 %v885, %v980
    %v982 = vpop.f32.mrb[0].mxu0
    %983 = vdwg.mxu0
    %v984 = vmax.f32 %v954, 0.0
    %v985 = vmax.f32 %v957, 0.0
    %v986 = vmax.f32 %v962, 0.0
    %v987 = vmax.f32 %v965, 0.0
    %v988 = vmax.f32 %v970, 0.0
    %v989 = vmax.f32 %v973, 0.0
    %v990 = vmax.f32 %v978, 0.0
    %v991 = vmax.f32 %v981, 0.0
    %s992 = scalar_lea.vmem %s4, 16
    %v993 = vld [vmem:[%s992] sm:$0xf]
    %v994 = vld [vmem:[%s992 + $0x4] sm:$0xf]
    %v995 = vld [vmem:[%s992 + $0x8] sm:$0xf]
    %v996 = vld [vmem:[%s992 + $0xc] sm:$0xf]
    %v997 = vpack.c.bf16 %v985, %v984
    %v998 = vpack.c.bf16 %v987, %v986
    %v999 = vpack.c.bf16 %v989, %v988
    %v1000 = vpack.c.bf16 %v991, %v990
    %1002 = vset.pattern.permute.xlu0 0
    %1003 = vperm.xlu0 %1002, %v647
    %v1004 = vpop.permute.xlu0 %1003
    %1007 = vset.pattern.permute.xlu0 0
    %1008 = vperm.xlu0 %1007, %v648
    %v1009 = vpop.permute.xlu0 %1008
    %1012 = vset.pattern.permute.xlu0 0
    %1013 = vperm.xlu0 %1012, %v649
    %v1014 = vpop.permute.xlu0 %1013
    %1017 = vset.pattern.permute.xlu0 0
    %1018 = vperm.xlu0 %1017, %v650
    %v1019 = vpop.permute.xlu0 %1018
    %v1025 = vunpack.c.l.b16 %v993
    %v1026 = vunpack.c.l.b16 %v994
    %v1027 = vunpack.c.l.b16 %v995
    %v1028 = vunpack.c.l.b16 %v996
    %v1029 = vpack.c.b16 %v1026, %v1025
    %v1030 = vpack.c.b16 %v1028, %v1027
    %v1032 = vsel %vm538, %v1029, 0
    %v1035 = vsel %vm538, %v1030, 0
    %1037 = vmatprep.subr.bf16.mxu0 0
    %1038 = vmatpush1.bf16.msra.mxu0 %v997
    %1039 = vmatprep.subr.bf16.mxu0 0
    %1040 = vmatpush1.bf16.msra.mxu0 %v998
    %1041 = vmatprep.subr.bf16.mxu0 0
    %1042 = vmatpush1.bf16.msra.mxu0 %v999
    %1043 = vmatprep.subr.bf16.mxu0 0
    %1044 = vmatpush1.bf16.msra.mxu0 %v1000
    %1045 = vmatprep.subr.bf16.mxu0 0
    %1046 = vmatpush1.bf16.msra.mxu0 0
    %1047 = vmatprep.subr.bf16.mxu0 0
    %1048 = vmatpush1.bf16.msra.mxu0 0
    %1049 = vmatprep.subr.bf16.mxu0 0
    %1050 = vmatpush1.bf16.msra.mxu0 0
    %1051 = vmatprep.subr.bf16.mxu0 0
    %1052 = vmatpush1.bf16.msra.mxu0 0
    %1053 = vmatprep.subr.bf16.mxu0 0
    %1054 = vmatpush1.bf16.msra.mxu0 0
    %1055 = vmatprep.subr.bf16.mxu0 0
    %1056 = vmatpush1.bf16.msra.mxu0 0
    %1057 = vmatprep.subr.bf16.mxu0 0
    %1058 = vmatpush1.bf16.msra.mxu0 0
    %1059 = vmatprep.subr.bf16.mxu0 0
    %1060 = vmatpush1.bf16.msra.mxu0 0
    %1061 = vmatprep.subr.bf16.mxu0 0
    %1062 = vmatpush1.bf16.msra.mxu0 0
    %1063 = vmatprep.subr.bf16.mxu0 0
    %1064 = vmatpush1.bf16.msra.mxu0 0
    %1065 = vmatprep.subr.bf16.mxu0 0
    %1066 = vmatpush1.bf16.msra.mxu0 0
    %1067 = vmatprep.subr.bf16.mxu0 0
    %1068 = vmatpush1.bf16.msra.mxu0 0
    %1069 = vmatprep.mubr.bf16.mxu0 0
    %1070 = vmatmul.mubr.bf16.gmra.mrb[0].mxu0 %v1032
    %v1071 = vpop.f32.mrb[0].mxu0
    %v1072 = vadd.f32 %v1004, %v1071
    %v1073 = vpop.f32.mrb[0].mxu0
    %v1074 = vpop.f32.mrb[0].mxu0
    %v1075 = vadd.f32 %v1009, %v1074
    %v1076 = vpop.f32.mrb[0].mxu0
    %1077 = vmatprep.mubr.bf16.mxu0 0
    %1078 = vmatmul.mubr.bf16.gmra.mrb[0].mxu0 %v1035
    %v1079 = vpop.f32.mrb[0].mxu0
    %v1080 = vadd.f32 %v1014, %v1079
    %v1081 = vpop.f32.mrb[0].mxu0
    %v1082 = vpop.f32.mrb[0].mxu0
    %v1083 = vadd.f32 %v1019, %v1082
    %v1084 = vpop.f32.mrb[0].mxu0
    %1085 = vdwg.mxu0
    %v1086 = vadd.f32 %v823, %v1072
    %v1087 = vadd.f32 %v824, %v1075
    %v1088 = vadd.f32 %v825, %v1080
    %v1089 = vadd.f32 %v826, %v1083
    %v1090 = vadd.f32 %v1086, %v1087
    %v1091 = vadd.f32 %v1090, %v1088
    %v1092 = vadd.f32 %v1091, %v1089
    %v1093 = vrot.slane %v1092, 4
    %v1094 = vadd.f32 %v1092, %v1093
    %v1095 = vrot.slane %v1094, 2
    %v1096 = vadd.f32 %v1094, %v1095
    %v1097 = vrot.slane %v1096, 1
    %v1098 = vadd.f32 %v1096, %v1097
    %v1099 = vmul.f32 %v1098, %v261
    %v1100 = vmul.f32 %v1086, %v1086
    %v1101 = vmul.f32 %v1087, %v1087
    %v1102 = vmul.f32 %v1088, %v1088
    %v1103 = vmul.f32 %v1089, %v1089
    %v1104 = vadd.f32 %v1100, %v1101
    %v1105 = vadd.f32 %v1104, %v1102
    %v1106 = vadd.f32 %v1105, %v1103
    %v1107 = vrot.slane %v1106, 4
    %v1108 = vadd.f32 %v1106, %v1107
    %v1109 = vrot.slane %v1108, 2
    %v1110 = vadd.f32 %v1108, %v1109
    %v1111 = vrot.slane %v1110, 1
    %v1112 = vadd.f32 %v1110, %v1111
    %v1113 = vmul.f32 %v1112, %v261
    %v1114 = vmul.f32 %v1099, %v1099
    %v1115 = vsub.f32 %v1113, %v1114
    %v1116 = vsub.f32 %v1086, %v1099
    %v1117 = vsub.f32 %v1087, %v1099
    %v1118 = vsub.f32 %v1088, %v1099
    %v1119 = vsub.f32 %v1089, %v1099
    %v1120 = vadd.f32 %v1115, 1e-05
    %v1121 = vrsqrt.pop %v1120
    %v1122 = vmul.f32 %v1116, %v1121
    %v1123 = vmul.f32 %v1117, %v1121
    %v1124 = vmul.f32 %v1118, %v1121
    %v1125 = vmul.f32 %v1119, %v1121
    %s1126 = scalar_lea.vmem %s7, 256
    %v1127 = vld [vmem:[%s1126] sm:$0xff]
    %v1128 = vld [vmem:[%s1126 + $0x8] sm:$0xff]
    %v1129 = vld [vmem:[%s1126 + $0x10] sm:$0xff]
    %v1130 = vld [vmem:[%s1126 + $0x18] sm:$0xff]
    %v1131 = vld [vmem:[%s1126 + $0x20] sm:$0xff]
    %v1132 = vld [vmem:[%s1126 + $0x28] sm:$0xff]
    %v1133 = vld [vmem:[%s1126 + $0x30] sm:$0xff]
    %v1134 = vld [vmem:[%s1126 + $0x38] sm:$0xff]
    %v1135 = vld [vmem:[%s1126 + $0x40] sm:$0xff]
    %v1136 = vld [vmem:[%s1126 + $0x48] sm:$0xff]
    %v1137 = vld [vmem:[%s1126 + $0x50] sm:$0xff]
    %v1138 = vld [vmem:[%s1126 + $0x58] sm:$0xff]
    %v1139 = vld [vmem:[%s1126 + $0x60] sm:$0xff]
    %v1140 = vld [vmem:[%s1126 + $0x68] sm:$0xff]
    %v1141 = vld [vmem:[%s1126 + $0x70] sm:$0xff]
    %v1142 = vld [vmem:[%s1126 + $0x78] sm:$0xff]
    %s1143 = scalar_lea.vmem %s2, 32
    %v1144 = vld [vmem:[%s1143] sm:$0xf]
    %v1145 = vld [vmem:[%s1143 + $0x4] sm:$0xf]
    %v1146 = vld [vmem:[%s1143 + $0x8] sm:$0xf]
    %v1147 = vld [vmem:[%s1143 + $0xc] sm:$0xf]
    %v1148 = vpack.c.bf16 %v1123, %v1122
    %v1149 = vpack.c.bf16 %v1125, %v1124
    %1151 = vset.pattern.permute.xlu0 0
    %1152 = vperm.xlu0 %1151, %v1127
    %v1153 = vpop.permute.xlu0 %1152
    %1156 = vset.pattern.permute.xlu0 0
    %1157 = vperm.xlu0 %1156, %v1128
    %v1158 = vpop.permute.xlu0 %1157
    %1161 = vset.pattern.permute.xlu0 0
    %1162 = vperm.xlu0 %1161, %v1129
    %v1163 = vpop.permute.xlu0 %1162
    %1166 = vset.pattern.permute.xlu0 0
    %1167 = vperm.xlu0 %1166, %v1130
    %v1168 = vpop.permute.xlu0 %1167
    %v1174 = vunpack.c.l.b16 %v1144
    %v1175 = vunpack.c.l.b16 %v1145
    %v1176 = vunpack.c.l.b16 %v1146
    %v1177 = vunpack.c.l.b16 %v1147
    %v1178 = vpack.c.b16 %v1175, %v1174
    %v1179 = vpack.c.b16 %v1177, %v1176
    %v1181 = vsel %vm196, %v1178, 0
    %v1184 = vsel %vm196, %v1179, 0
    %1186 = vmatprep.subr.bf16.mxu0 0
    %1187 = vmatpush1.bf16.msra.mxu0 %v1148
    %1188 = vmatprep.subr.bf16.mxu0 0
    %1189 = vmatpush1.bf16.msra.mxu0 %v1149
    %1190 = vmatprep.subr.bf16.mxu0 0
    %1191 = vmatpush1.bf16.msra.mxu0 0
    %1192 = vmatprep.subr.bf16.mxu0 0
    %1193 = vmatpush1.bf16.msra.mxu0 0
    %1194 = vmatprep.subr.bf16.mxu0 0
    %1195 = vmatpush1.bf16.msra.mxu0 0
    %1196 = vmatprep.subr.bf16.mxu0 0
    %1197 = vmatpush1.bf16.msra.mxu0 0
    %1198 = vmatprep.subr.bf16.mxu0 0
    %1199 = vmatpush1.bf16.msra.mxu0 0
    %1200 = vmatprep.subr.bf16.mxu0 0
    %1201 = vmatpush1.bf16.msra.mxu0 0
    %1202 = vmatprep.subr.bf16.mxu0 0
    %1203 = vmatpush1.bf16.msra.mxu0 0
    %1204 = vmatprep.subr.bf16.mxu0 0
    %1205 = vmatpush1.bf16.msra.mxu0 0
    %1206 = vmatprep.subr.bf16.mxu0 0
    %1207 = vmatpush1.bf16.msra.mxu0 0
    %1208 = vmatprep.subr.bf16.mxu0 0
    %1209 = vmatpush1.bf16.msra.mxu0 0
    %1210 = vmatprep.subr.bf16.mxu0 0
    %1211 = vmatpush1.bf16.msra.mxu0 0
    %1212 = vmatprep.subr.bf16.mxu0 0
    %1213 = vmatpush1.bf16.msra.mxu0 0
    %1214 = vmatprep.subr.bf16.mxu0 0
    %1215 = vmatpush1.bf16.msra.mxu0 0
    %1216 = vmatprep.subr.bf16.mxu0 0
    %1217 = vmatpush1.bf16.msra.mxu0 0
    %1218 = vmatprep.mubr.bf16.mxu0 0
    %1219 = vmatmul.mubr.bf16.gmra.mrb[0].mxu0 %v1181
    %v1220 = vpop.f32.mrb[0].mxu0
    %v1221 = vadd.f32 %v1153, %v1220
    %v1222 = vpop.f32.mrb[0].mxu0
    %v1223 = vpop.f32.mrb[0].mxu0
    %v1224 = vadd.f32 %v1158, %v1223
    %v1225 = vpop.f32.mrb[0].mxu0
    %1226 = vmatprep.mubr.bf16.mxu0 0
    %1227 = vmatmul.mubr.bf16.gmra.mrb[0].mxu0 %v1184
    %v1228 = vpop.f32.mrb[0].mxu0
    %v1229 = vadd.f32 %v1163, %v1228
    %v1230 = vpop.f32.mrb[0].mxu0
    %v1231 = vpop.f32.mrb[0].mxu0
    %v1232 = vadd.f32 %v1168, %v1231
    %v1233 = vpop.f32.mrb[0].mxu0
    %1234 = vdwg.mxu0
    %v1235 = vadd.f32 %v1221, %v1224
    %v1236 = vadd.f32 %v1235, %v1229
    %v1237 = vadd.f32 %v1236, %v1232
    %v1238 = vrot.slane %v1237, 4
    %v1239 = vadd.f32 %v1237, %v1238
    %v1240 = vrot.slane %v1239, 2
    %v1241 = vadd.f32 %v1239, %v1240
    %v1242 = vrot.slane %v1241, 1
    %v1243 = vadd.f32 %v1241, %v1242
    %v1244 = vmul.f32 %v1243, %v261
    %v1245 = vmul.f32 %v1221, %v1221
    %v1246 = vmul.f32 %v1224, %v1224
    %v1247 = vmul.f32 %v1229, %v1229
    %v1248 = vmul.f32 %v1232, %v1232
    %v1249 = vadd.f32 %v1245, %v1246
    %v1250 = vadd.f32 %v1249, %v1247
    %v1251 = vadd.f32 %v1250, %v1248
    %v1252 = vrot.slane %v1251, 4
    %v1253 = vadd.f32 %v1251, %v1252
    %v1254 = vrot.slane %v1253, 2
    %v1255 = vadd.f32 %v1253, %v1254
    %v1256 = vrot.slane %v1255, 1
    %v1257 = vadd.f32 %v1255, %v1256
    %v1258 = vmul.f32 %v1257, %v261
    %v1259 = vmul.f32 %v1244, %v1244
    %v1260 = vsub.f32 %v1258, %v1259
    %v1261 = vsub.f32 %v1221, %v1244
    %v1262 = vsub.f32 %v1224, %v1244
    %v1263 = vsub.f32 %v1229, %v1244
    %v1264 = vsub.f32 %v1232, %v1244
    %v1265 = vadd.f32 %v1260, 1e-05
    %v1266 = vrsqrt.pop %v1265
    %v1267 = vmul.f32 %v1261, %v1266
    %v1268 = vmul.f32 %v1262, %v1266
    %v1269 = vmul.f32 %v1263, %v1266
    %v1270 = vmul.f32 %v1264, %v1266
    %1272 = vset.pattern.permute.xlu0 0
    %1273 = vperm.xlu0 %1272, %v1131
    %v1274 = vpop.permute.xlu0 %1273
    %1277 = vset.pattern.permute.xlu0 0
    %1278 = vperm.xlu0 %1277, %v1132
    %v1279 = vpop.permute.xlu0 %1278
    %1282 = vset.pattern.permute.xlu0 0
    %1283 = vperm.xlu0 %1282, %v1133
    %v1284 = vpop.permute.xlu0 %1283
    %1287 = vset.pattern.permute.xlu0 0
    %1288 = vperm.xlu0 %1287, %v1134
    %v1289 = vpop.permute.xlu0 %1288
    %v1291 = vmul.f32 %v1267, %v1274
    %v1292 = vmul.f32 %v1268, %v1279
    %v1293 = vmul.f32 %v1269, %v1284
    %v1294 = vmul.f32 %v1270, %v1289
    %1296 = vset.pattern.permute.xlu0 0
    %1297 = vperm.xlu0 %1296, %v1135
    %v1298 = vpop.permute.xlu0 %1297
    %1301 = vset.pattern.permute.xlu0 0
    %1302 = vperm.xlu0 %1301, %v1136
    %v1303 = vpop.permute.xlu0 %1302
    %1306 = vset.pattern.permute.xlu0 0
    %1307 = vperm.xlu0 %1306, %v1137
    %v1308 = vpop.permute.xlu0 %1307
    %1311 = vset.pattern.permute.xlu0 0
    %1312 = vperm.xlu0 %1311, %v1138
    %v1313 = vpop.permute.xlu0 %1312
    %v1315 = vadd.f32 %v1291, %v1298
    %v1316 = vadd.f32 %v1292, %v1303
    %v1317 = vadd.f32 %v1293, %v1308
    %v1318 = vadd.f32 %v1294, %v1313
    %s1319 = scalar_lea.vmem %s3, 64
    %v1320 = vld [vmem:[%s1319] sm:$0xf]
    %v1321 = vld [vmem:[%s1319 + $0x4] sm:$0xf]
    %v1322 = vld [vmem:[%s1319 + $0x8] sm:$0xf]
    %v1323 = vld [vmem:[%s1319 + $0xc] sm:$0xf]
    %v1324 = vld [vmem:[%s1319 + $0x10] sm:$0xf]
    %v1325 = vld [vmem:[%s1319 + $0x14] sm:$0xf]
    %v1326 = vld [vmem:[%s1319 + $0x18] sm:$0xf]
    %v1327 = vld [vmem:[%s1319 + $0x1c] sm:$0xf]
    %v1328 = vpack.c.bf16 %v1316, %v1315
    %v1329 = vpack.c.bf16 %v1318, %v1317
    %s1330 = scalar_lea.vmem %s8, 128
    %v1331 = vld [vmem:[%s1330] sm:$0xff]
    %v1332 = vld [vmem:[%s1330 + $0x8] sm:$0xff]
    %v1333 = vld [vmem:[%s1330 + $0x10] sm:$0xff]
    %v1334 = vld [vmem:[%s1330 + $0x18] sm:$0xff]
    %v1335 = vld [vmem:[%s1330 + $0x20] sm:$0xff]
    %v1336 = vld [vmem:[%s1330 + $0x28] sm:$0xff]
    %v1337 = vld [vmem:[%s1330 + $0x30] sm:$0xff]
    %v1338 = vld [vmem:[%s1330 + $0x38] sm:$0xff]
    %1340 = vset.pattern.permute.xlu0 0
    %1341 = vperm.xlu0 %1340, %v1331
    %v1342 = vpop.permute.xlu0 %1341
    %1345 = vset.pattern.permute.xlu0 0
    %1346 = vperm.xlu0 %1345, %v1332
    %v1347 = vpop.permute.xlu0 %1346
    %1350 = vset.pattern.permute.xlu0 0
    %1351 = vperm.xlu0 %1350, %v1333
    %v1352 = vpop.permute.xlu0 %1351
    %1355 = vset.pattern.permute.xlu0 0
    %1356 = vperm.xlu0 %1355, %v1334
    %v1357 = vpop.permute.xlu0 %1356
    %1360 = vset.pattern.permute.xlu0 0
    %1361 = vperm.xlu0 %1360, %v1335
    %v1362 = vpop.permute.xlu0 %1361
    %1365 = vset.pattern.permute.xlu0 0
    %1366 = vperm.xlu0 %1365, %v1336
    %v1367 = vpop.permute.xlu0 %1366
    %1370 = vset.pattern.permute.xlu0 0
    %1371 = vperm.xlu0 %1370, %v1337
    %v1372 = vpop.permute.xlu0 %1371
    %1375 = vset.pattern.permute.xlu0 0
    %1376 = vperm.xlu0 %1375, %v1338
    %v1377 = vpop.permute.xlu0 %1376
    %v1387 = vunpack.c.l.b16 %v1320
    %v1388 = vunpack.c.l.b16 %v1321
    %v1389 = vunpack.c.l.b16 %v1322
    %v1390 = vunpack.c.l.b16 %v1323
    %v1391 = vunpack.c.l.b16 %v1324
    %v1392 = vunpack.c.l.b16 %v1325
    %v1393 = vunpack.c.l.b16 %v1326
    %v1394 = vunpack.c.l.b16 %v1327
    %v1395 = vpack.c.b16 %v1388, %v1387
    %v1396 = vpack.c.b16 %v1390, %v1389
    %v1397 = vpack.c.b16 %v1392, %v1391
    %v1398 = vpack.c.b16 %v1394, %v1393
    %v1400 = vsel %vm196, %v1395, 0
    %v1403 = vsel %vm196, %v1396, 0
    %v1406 = vsel %vm196, %v1397, 0
    %v1409 = vsel %vm196, %v1398, 0
    %1411 = vmatprep.subr.bf16.mxu0 0
    %1412 = vmatpush1.bf16.msra.mxu0 %v1328
    %1413 = vmatprep.subr.bf16.mxu0 0
    %1414 = vmatpush1.bf16.msra.mxu0 %v1329
    %1415 = vmatprep.subr.bf16.mxu0 0
    %1416 = vmatpush1.bf16.msra.mxu0 0
    %1417 = vmatprep.subr.bf16.mxu0 0
    %1418 = vmatpush1.bf16.msra.mxu0 0
    %1419 = vmatprep.subr.bf16.mxu0 0
    %1420 = vmatpush1.bf16.msra.mxu0 0
    %1421 = vmatprep.subr.bf16.mxu0 0
    %1422 = vmatpush1.bf16.msra.mxu0 0
    %1423 = vmatprep.subr.bf16.mxu0 0
    %1424 = vmatpush1.bf16.msra.mxu0 0
    %1425 = vmatprep.subr.bf16.mxu0 0
    %1426 = vmatpush1.bf16.msra.mxu0 0
    %1427 = vmatprep.subr.bf16.mxu0 0
    %1428 = vmatpush1.bf16.msra.mxu0 0
    %1429 = vmatprep.subr.bf16.mxu0 0
    %1430 = vmatpush1.bf16.msra.mxu0 0
    %1431 = vmatprep.subr.bf16.mxu0 0
    %1432 = vmatpush1.bf16.msra.mxu0 0
    %1433 = vmatprep.subr.bf16.mxu0 0
    %1434 = vmatpush1.bf16.msra.mxu0 0
    %1435 = vmatprep.subr.bf16.mxu0 0
    %1436 = vmatpush1.bf16.msra.mxu0 0
    %1437 = vmatprep.subr.bf16.mxu0 0
    %1438 = vmatpush1.bf16.msra.mxu0 0
    %1439 = vmatprep.subr.bf16.mxu0 0
    %1440 = vmatpush1.bf16.msra.mxu0 0
    %1441 = vmatprep.subr.bf16.mxu0 0
    %1442 = vmatpush1.bf16.msra.mxu0 0
    %1443 = vmatprep.mubr.bf16.mxu0 0
    %1444 = vmatmul.mubr.bf16.gmra.mrb[0].mxu0 %v1400
    %v1445 = vpop.f32.mrb[0].mxu0
    %v1446 = vadd.f32 %v1342, %v1445
    %v1447 = vpop.f32.mrb[0].mxu0
    %v1448 = vpop.f32.mrb[0].mxu0
    %v1449 = vadd.f32 %v1347, %v1448
    %v1450 = vpop.f32.mrb[0].mxu0
    %1451 = vmatprep.mubr.bf16.mxu0 0
    %1452 = vmatmul.mubr.bf16.gmra.mrb[0].mxu0 %v1403
    %v1453 = vpop.f32.mrb[0].mxu0
    %v1454 = vadd.f32 %v1352, %v1453
    %v1455 = vpop.f32.mrb[0].mxu0
    %v1456 = vpop.f32.mrb[0].mxu0
    %v1457 = vadd.f32 %v1357, %v1456
    %v1458 = vpop.f32.mrb[0].mxu0
    %1459 = vmatprep.mubr.bf16.mxu0 0
    %1460 = vmatmul.mubr.bf16.gmra.mrb[0].mxu0 %v1406
    %v1461 = vpop.f32.mrb[0].mxu0
    %v1462 = vadd.f32 %v1362, %v1461
    %v1463 = vpop.f32.mrb[0].mxu0
    %v1464 = vpop.f32.mrb[0].mxu0
    %v1465 = vadd.f32 %v1367, %v1464
    %v1466 = vpop.f32.mrb[0].mxu0
    %1467 = vmatprep.mubr.bf16.mxu0 0
    %1468 = vmatmul.mubr.bf16.gmra.mrb[0].mxu0 %v1409
    %v1469 = vpop.f32.mrb[0].mxu0
    %v1470 = vadd.f32 %v1372, %v1469
    %v1471 = vpop.f32.mrb[0].mxu0
    %v1472 = vpop.f32.mrb[0].mxu0
    %v1473 = vadd.f32 %v1377, %v1472
    %v1474 = vpop.f32.mrb[0].mxu0
    %1475 = vdwg.mxu0
    %v1476 = vmax.f32 %v1446, 0.0
    %v1477 = vmax.f32 %v1449, 0.0
    %v1478 = vmax.f32 %v1454, 0.0
    %v1479 = vmax.f32 %v1457, 0.0
    %v1480 = vmax.f32 %v1462, 0.0
    %v1481 = vmax.f32 %v1465, 0.0
    %v1482 = vmax.f32 %v1470, 0.0
    %v1483 = vmax.f32 %v1473, 0.0
    %s1484 = scalar_lea.vmem %s4, 32
    %v1485 = vld [vmem:[%s1484] sm:$0xf]
    %v1486 = vld [vmem:[%s1484 + $0x4] sm:$0xf]
    %v1487 = vld [vmem:[%s1484 + $0x8] sm:$0xf]
    %v1488 = vld [vmem:[%s1484 + $0xc] sm:$0xf]
    %v1489 = vpack.c.bf16 %v1477, %v1476
    %v1490 = vpack.c.bf16 %v1479, %v1478
    %v1491 = vpack.c.bf16 %v1481, %v1480
    %v1492 = vpack.c.bf16 %v1483, %v1482
    %1494 = vset.pattern.permute.xlu0 0
    %1495 = vperm.xlu0 %1494, %v1139
    %v1496 = vpop.permute.xlu0 %1495
    %1499 = vset.pattern.permute.xlu0 0
    %1500 = vperm.xlu0 %1499, %v1140
    %v1501 = vpop.permute.xlu0 %1500
    %1504 = vset.pattern.permute.xlu0 0
    %1505 = vperm.xlu0 %1504, %v1141
    %v1506 = vpop.permute.xlu0 %1505
    %1509 = vset.pattern.permute.xlu0 0
    %1510 = vperm.xlu0 %1509, %v1142
    %v1511 = vpop.permute.xlu0 %1510
    %v1517 = vunpack.c.l.b16 %v1485
    %v1518 = vunpack.c.l.b16 %v1486
    %v1519 = vunpack.c.l.b16 %v1487
    %v1520 = vunpack.c.l.b16 %v1488
    %v1521 = vpack.c.b16 %v1518, %v1517
    %v1522 = vpack.c.b16 %v1520, %v1519
    %v1524 = vsel %vm538, %v1521, 0
    %v1527 = vsel %vm538, %v1522, 0
    %1529 = vmatprep.subr.bf16.mxu0 0
    %1530 = vmatpush1.bf16.msra.mxu0 %v1489
    %1531 = vmatprep.subr.bf16.mxu0 0
    %1532 = vmatpush1.bf16.msra.mxu0 %v1490
    %1533 = vmatprep.subr.bf16.mxu0 0
    %1534 = vmatpush1.bf16.msra.mxu0 %v1491
    %1535 = vmatprep.subr.bf16.mxu0 0
    %1536 = vmatpush1.bf16.msra.mxu0 %v1492
    %1537 = vmatprep.subr.bf16.mxu0 0
    %1538 = vmatpush1.bf16.msra.mxu0 0
    %1539 = vmatprep.subr.bf16.mxu0 0
    %1540 = vmatpush1.bf16.msra.mxu0 0
    %1541 = vmatprep.subr.bf16.mxu0 0
    %1542 = vmatpush1.bf16.msra.mxu0 0
    %1543 = vmatprep.subr.bf16.mxu0 0
    %1544 = vmatpush1.bf16.msra.mxu0 0
    %1545 = vmatprep.subr.bf16.mxu0 0
    %1546 = vmatpush1.bf16.msra.mxu0 0
    %1547 = vmatprep.subr.bf16.mxu0 0
    %1548 = vmatpush1.bf16.msra.mxu0 0
    %1549 = vmatprep.subr.bf16.mxu0 0
    %1550 = vmatpush1.bf16.msra.mxu0 0
    %1551 = vmatprep.subr.bf16.mxu0 0
    %1552 = vmatpush1.bf16.msra.mxu0 0
    %1553 = vmatprep.subr.bf16.mxu0 0
    %1554 = vmatpush1.bf16.msra.mxu0 0
    %1555 = vmatprep.subr.bf16.mxu0 0
    %1556 = vmatpush1.bf16.msra.mxu0 0
    %1557 = vmatprep.subr.bf16.mxu0 0
    %1558 = vmatpush1.bf16.msra.mxu0 0
    %1559 = vmatprep.subr.bf16.mxu0 0
    %1560 = vmatpush1.bf16.msra.mxu0 0
    %1561 = vmatprep.mubr.bf16.mxu0 0
    %1562 = vmatmul.mubr.bf16.gmra.mrb[0].mxu0 %v1524
    %v1563 = vpop.f32.mrb[0].mxu0
    %v1564 = vadd.f32 %v1496, %v1563
    %v1565 = vpop.f32.mrb[0].mxu0
    %v1566 = vpop.f32.mrb[0].mxu0
    %v1567 = vadd.f32 %v1501, %v1566
    %v1568 = vpop.f32.mrb[0].mxu0
    %1569 = vmatprep.mubr.bf16.mxu0 0
    %1570 = vmatmul.mubr.bf16.gmra.mrb[0].mxu0 %v1527
    %v1571 = vpop.f32.mrb[0].mxu0
    %v1572 = vadd.f32 %v1506, %v1571
    %v1573 = vpop.f32.mrb[0].mxu0
    %v1574 = vpop.f32.mrb[0].mxu0
    %v1575 = vadd.f32 %v1511, %v1574
    %v1576 = vpop.f32.mrb[0].mxu0
    %1577 = vdwg.mxu0
    %v1578 = vadd.f32 %v1315, %v1564
    %v1579 = vadd.f32 %v1316, %v1567
    %v1580 = vadd.f32 %v1317, %v1572
    %v1581 = vadd.f32 %v1318, %v1575
    %v1582 = vadd.f32 %v1578, %v1579
    %v1583 = vadd.f32 %v1582, %v1580
    %v1584 = vadd.f32 %v1583, %v1581
    %v1585 = vrot.slane %v1584, 4
    %v1586 = vadd.f32 %v1584, %v1585
    %v1587 = vrot.slane %v1586, 2
    %v1588 = vadd.f32 %v1586, %v1587
    %v1589 = vrot.slane %v1588, 1
    %v1590 = vadd.f32 %v1588, %v1589
    %v1591 = vmul.f32 %v1590, %v261
    %v1592 = vmul.f32 %v1578, %v1578
    %v1593 = vmul.f32 %v1579, %v1579
    %v1594 = vmul.f32 %v1580, %v1580
    %v1595 = vmul.f32 %v1581, %v1581
    %v1596 = vadd.f32 %v1592, %v1593
    %v1597 = vadd.f32 %v1596, %v1594
    %v1598 = vadd.f32 %v1597, %v1595
    %v1599 = vrot.slane %v1598, 4
    %v1600 = vadd.f32 %v1598, %v1599
    %v1601 = vrot.slane %v1600, 2
    %v1602 = vadd.f32 %v1600, %v1601
    %v1603 = vrot.slane %v1602, 1
    %v1604 = vadd.f32 %v1602, %v1603
    %v1605 = vmul.f32 %v1604, %v261
    %v1606 = vmul.f32 %v1591, %v1591
    %v1607 = vsub.f32 %v1605, %v1606
    %v1608 = vsub.f32 %v1578, %v1591
    %v1609 = vsub.f32 %v1579, %v1591
    %v1610 = vsub.f32 %v1580, %v1591
    %v1611 = vsub.f32 %v1581, %v1591
    %v1612 = vadd.f32 %v1607, 1e-05
    %v1613 = vrsqrt.pop %v1612
    %v1614 = vmul.f32 %v1608, %v1613
    %v1615 = vmul.f32 %v1609, %v1613
    %v1616 = vmul.f32 %v1610, %v1613
    %v1617 = vmul.f32 %v1611, %v1613
    %v1618 = vld [vmem:[%s5] sm:$0x1]
    %v1619 = vpack.c.bf16 %v1615, %v1614
    %v1620 = vpack.c.bf16 %v1617, %v1616
    %v1621 = vld [vmem:[#allocation2] sm:$0x1]
    %1623 = vset.pattern.permute.xlu0 0
    %1624 = vperm.xlu0 %1623, %v1621
    %v1625 = vpop.permute.xlu0 %1624
    %v1627 = vlaneseq
    %v1628 = vshrl.u32 %v1627, 7
    %v1629 = vsub.s32 0, %v1628
    %v1630 = vrot.slane %v1625, %v1629
    %v1632 = vsel %vm196, %v1618, 0
    %1634 = vmatprep.subr.bf16.mxu0 0
    %1635 = vmatpush1.bf16.msra.mxu0 %v1619
    %1636 = vmatprep.subr.bf16.mxu0 0
    %1637 = vmatpush1.bf16.msra.mxu0 %v1620
    %1638 = vmatprep.subr.bf16.mxu0 0
    %1639 = vmatpush1.bf16.msra.mxu0 0
    %1640 = vmatprep.subr.bf16.mxu0 0
    %1641 = vmatpush1.bf16.msra.mxu0 0
    %1642 = vmatprep.subr.bf16.mxu0 0
    %1643 = vmatpush1.bf16.msra.mxu0 0
    %1644 = vmatprep.subr.bf16.mxu0 0
    %1645 = vmatpush1.bf16.msra.mxu0 0
    %1646 = vmatprep.subr.bf16.mxu0 0
    %1647 = vmatpush1.bf16.msra.mxu0 0
    %1648 = vmatprep.subr.bf16.mxu0 0
    %1649 = vmatpush1.bf16.msra.mxu0 0
    %1650 = vmatprep.subr.bf16.mxu0 0
    %1651 = vmatpush1.bf16.msra.mxu0 0
    %1652 = vmatprep.subr.bf16.mxu0 0
    %1653 = vmatpush1.bf16.msra.mxu0 0
    %1654 = vmatprep.subr.bf16.mxu0 0
    %1655 = vmatpush1.bf16.msra.mxu0 0
    %1656 = vmatprep.subr.bf16.mxu0 0
    %1657 = vmatpush1.bf16.msra.mxu0 0
    %1658 = vmatprep.subr.bf16.mxu0 0
    %1659 = vmatpush1.bf16.msra.mxu0 0
    %1660 = vmatprep.subr.bf16.mxu0 0
    %1661 = vmatpush1.bf16.msra.mxu0 0
    %1662 = vmatprep.subr.bf16.mxu0 0
    %1663 = vmatpush1.bf16.msra.mxu0 0
    %1664 = vmatprep.subr.bf16.mxu0 0
    %1665 = vmatpush1.bf16.msra.mxu0 0
    %1666 = vmatprep.mubr.bf16.mxu0 0
    %1667 = vmatmul.mubr.bf16.gmra.mrb[0].mxu0 %v1632
    %v1668 = vpop.f32.mrb[0].mxu0
    %v1669 = vadd.f32 %v1630, %v1668
    %v1670 = vpop.f32.mrb[0].mxu0
    %v1671 = vpop.f32.mrb[0].mxu0
    %v1672 = vpop.f32.mrb[0].mxu0
    %1673 = vdwg.mxu0
    %1674 = vst [vmem:[#allocation3] sm:$0x1] %v1669
    // Predicated region
    $region42: #{tpu_custom_call.1} parent=1 // pred_check
      _
    $region43: #{tpu_custom_call.1} parent=1 // pred_check_branch
      %1676 = sbr.rel (0) target = $region45
    $region44: #{tpu_custom_call.1} parent=1 // pred_region
      %s1678 = ssub.s32 16, 16
      %1679 = vsyncadd [#allocation4], %s1678
      %s1681 = sshll.u32 [#allocation3], 4
      %s1682 = int_to_ptr.vmem [resolvable:$true] %s1681
      %1684 = dma.vmem_to_hbm [thread:$0]  %s1682, 16, %s10, [#allocation4]
    $region45: #{tpu_custom_call.1} parent=1 // pred_fallthru
      _
    // Predicated region
    $region46: #{tpu_custom_call.1} parent=1 // pred_check
      _
    $region47: #{tpu_custom_call.1} parent=1 // pred_check_branch
      %1686 = sbr.rel (0) target = $region49
    $region48: #{tpu_custom_call.1} parent=1 // pred_region
      %1687 = dma.done [#allocation4], 16
    $region49: #{tpu_custom_call.1} parent=1 // pred_fallthru
      _
    %1688 = vsyncpa [#allocation4], 1

</llo_original>
